<compile_context>
chip_gen: v7x
topology: tpu7x:2x2x1
jax: 0.10.0
libtpu: 0.0.40
codegen_flags: <defaults>
</compile_context>

<pallas_src>
import jax
import jax.numpy as jnp
from jax import lax
from jax.experimental import pallas as pl
from jax.experimental.pallas import tpu as pltpu

EPS = 1e-5


def add_layernorm_kernel(x_ref, y_ref, g_ref, b_ref, o_ref):
    # x_ref, y_ref: (tm, H) tiles of the two inputs
    # g_ref, b_ref: (1, H) layernorm scale / bias (broadcast over rows)
    x = x_ref[...].astype(jnp.float32) + y_ref[...].astype(jnp.float32)
    h = x.shape[-1]
    inv_h = jnp.float32(1.0 / h)
    # Two-pass, cancellation-free statistics (var >= 0 by construction).
    mean = jnp.sum(x, axis=-1, keepdims=True) * inv_h
    xc = x - mean
    var = jnp.sum(xc * xc, axis=-1, keepdims=True) * inv_h
    inv = lax.rsqrt(var + jnp.float32(EPS))
    g = g_ref[...].astype(jnp.float32)
    b = b_ref[...].astype(jnp.float32)
    o_ref[...] = (xc * inv * g + b).astype(o_ref.dtype)


def _default_tm():
    """Per-chip default row-tile size (see header comment)."""
    try:
        kind = jax.devices()[0].device_kind.lower()
    except Exception:  # pragma: no cover - be robust on odd runtimes
        return 192
    if "v5" in kind:          # v5e / v5 lite: grid = 3
        return 128
    if "7" in kind:           # v7x: grid = 4 -> 2 steps per TensorCore
        return 96
    return 192                # v6e and default: grid = 2


def _pick_tm(R, requested):
    """Largest divisor of R that is <= requested and a multiple of 8
    (falls back to R itself if nothing else works)."""
    for tm in range(min(requested, R), 7, -1):
        if R % tm == 0 and tm % 8 == 0:
            return tm
    return R  # full-extent block is always legal


def add_layernorm(x320, x316, gamma, beta, *, tm=None):
    assert x320.shape == x316.shape
    orig_shape = x320.shape
    H = orig_shape[-1]
    x2 = x320.reshape(-1, H)
    y2 = x316.reshape(-1, H)
    R = x2.shape[0]

    if tm is None:
        tm = _default_tm()
    tm = _pick_tm(R, tm)

    g2 = gamma.reshape(1, H)
    b2 = beta.reshape(1, H)

    in_bytes = jnp.dtype(x320.dtype).itemsize
    cost = pl.CostEstimate(
        flops=10 * R * H,                       # add, center, square, scale, affine, reductions
        transcendentals=R,                      # one rsqrt per row
        bytes_accessed=R * H * 3 * in_bytes + 2 * H * 4,
    )

    out = pl.pallas_call(
        add_layernorm_kernel,
        out_shape=jax.ShapeDtypeStruct((R, H), x320.dtype),
        grid_spec=pl.GridSpec(
            grid=(R // tm,),
            in_specs=[
                pl.BlockSpec((tm, H), lambda i: (i, 0)),
                pl.BlockSpec((tm, H), lambda i: (i, 0)),
                pl.BlockSpec((1, H), lambda i: (0, 0)),
                pl.BlockSpec((1, H), lambda i: (0, 0)),
            ],
            out_specs=pl.BlockSpec((tm, H), lambda i: (i, 0)),
        ),
        compiler_params=pltpu.CompilerParams(
            dimension_semantics=("parallel",)
        ),
        cost_estimate=cost,
    )(x2, y2, g2, b2)
    return out.reshape(orig_shape)


def reference(x320, x316, gamma, beta):
    x = x320.astype(jnp.float32) + x316.astype(jnp.float32)
    mean = jnp.mean(x, axis=-1, keepdims=True)
    var = jnp.mean((x - mean) ** 2, axis=-1, keepdims=True)
    return ((x - mean) * lax.rsqrt(var + EPS) * gamma + beta).astype(x320.dtype)


if __name__ == "__main__":
    key = jax.random.PRNGKey(0)
    k1, k2, k3, k4 = jax.random.split(key, 4)

    B, S, H = 1, 384, 768

    # Deterministic LayerNorm parameters (shape (768,) per module __init__;
    # perturbed from the init values to exercise the affine path).
    gamma = 1.0 + 0.02 * jax.random.normal(k3, (H,), dtype=jnp.float32)
    beta = 0.02 * jax.random.normal(k4, (H,), dtype=jnp.float32)

    # f32 test with a deliberately shifted mean (|mean| >> std) to exercise
    # the numerically-stable two-pass variance path.
    x320 = jax.random.normal(k1, (B, S, H), dtype=jnp.float32) + 6.0
    x316 = jax.random.normal(k2, (B, S, H), dtype=jnp.float32) - 2.0

    out = add_layernorm(x320, x316, gamma, beta)
    out = jax.block_until_ready(out)
    ref = reference(x320, x316, gamma, beta)
    assert out.shape == (B, S, H)
    assert bool(jnp.all(jnp.isfinite(out)))
    assert jnp.allclose(out, ref, atol=1e-4, rtol=1e-4), (
        float(jnp.max(jnp.abs(out - ref)))
    )

    # bf16 I/O smoke test (math stays f32 inside the kernel).
    xb = x320.astype(jnp.bfloat16)
    yb = x316.astype(jnp.bfloat16)
    out_bf16 = jax.block_until_ready(add_layernorm(xb, yb, gamma, beta))
    ref_bf16 = reference(xb, yb, gamma, beta)
    assert out_bf16.dtype == jnp.bfloat16
    assert jnp.allclose(out_bf16.astype(jnp.float32),
                        ref_bf16.astype(jnp.float32),
                        atol=3e-2, rtol=3e-2), (
        float(jnp.max(jnp.abs(out_bf16.astype(jnp.float32)
                              - ref_bf16.astype(jnp.float32))))
    )

    print("KERNEL_OK")
</pallas_src>

<mosaic_0001>
module attributes {stable_mosaic.version = 11 : i64} {
  func.func @add_layernorm_kernel(%arg0: i32, %arg1: memref<192x768xf32, #tpu.memory_space<vmem>>, %arg2: memref<192x768xf32, #tpu.memory_space<vmem>>, %arg3: memref<1x768xf32, #tpu.memory_space<vmem>>, %arg4: memref<1x768xf32, #tpu.memory_space<vmem>>, %arg5: memref<192x768xf32, #tpu.memory_space<vmem>>) attributes {dimension_semantics = [#tpu.dimension_semantics<parallel>], iteration_bounds = array<i64: 2>, scalar_prefetch = 0 : i64, scratch_operands = 0 : i64, tpu.core_type = #tpu.core_type<tc>, window_params = [{transform_indices = @transform_0, window_bounds = array<i64: 192, 768>}, {transform_indices = @transform_1, window_bounds = array<i64: 192, 768>}, {pipeline_mode = #tpu.pipeline_mode<synchronous>, transform_indices = @transform_2, window_bounds = array<i64: 1, 768>}, {pipeline_mode = #tpu.pipeline_mode<synchronous>, transform_indices = @transform_3, window_bounds = array<i64: 1, 768>}, {transform_indices = @transform_4, window_bounds = array<i64: 192, 768>}]} {
    %c0 = arith.constant 0 : index
    %c0_0 = arith.constant 0 : index
    %0 = vector.load %arg1[%c0, %c0_0] : memref<192x768xf32, #tpu.memory_space<vmem>>, vector<192x768xf32>
    %c0_1 = arith.constant 0 : index
    %c0_2 = arith.constant 0 : index
    %1 = vector.load %arg2[%c0_1, %c0_2] : memref<192x768xf32, #tpu.memory_space<vmem>>, vector<192x768xf32>
    %2 = arith.addf %0, %1 : vector<192x768xf32>
    %cst = arith.constant dense<0.000000e+00> : vector<192xf32>
    %3 = vector.multi_reduction <add>, %2, %cst [1] : vector<192x768xf32> to vector<192xf32>
    %4 = vector.shape_cast %3 : vector<192xf32> to vector<192x1xf32>
    %cst_3 = arith.constant 0.00130208337 : f32
    %5 = vector.broadcast %cst_3 : f32 to vector<192x1xf32>
    %6 = arith.mulf %4, %5 : vector<192x1xf32>
    %7 = vector.broadcast %6 : vector<192x1xf32> to vector<192x768xf32>
    %8 = arith.subf %2, %7 : vector<192x768xf32>
    %9 = arith.mulf %8, %8 : vector<192x768xf32>
    %cst_4 = arith.constant dense<0.000000e+00> : vector<192xf32>
    %10 = vector.multi_reduction <add>, %9, %cst_4 [1] : vector<192x768xf32> to vector<192xf32>
    %11 = vector.shape_cast %10 : vector<192xf32> to vector<192x1xf32>
    %cst_5 = arith.constant 0.00130208337 : f32
    %12 = vector.broadcast %cst_5 : f32 to vector<192x1xf32>
    %13 = arith.mulf %11, %12 : vector<192x1xf32>
    %cst_6 = arith.constant 9.99999974E-6 : f32
    %14 = vector.broadcast %cst_6 : f32 to vector<192x1xf32>
    %15 = arith.addf %13, %14 : vector<192x1xf32>
    %16 = math.rsqrt %15 : vector<192x1xf32>
    %c0_7 = arith.constant 0 : index
    %c0_8 = arith.constant 0 : index
    %17 = vector.load %arg3[%c0_7, %c0_8] : memref<1x768xf32, #tpu.memory_space<vmem>>, vector<1x768xf32>
    %c0_9 = arith.constant 0 : index
    %c0_10 = arith.constant 0 : index
    %18 = vector.load %arg4[%c0_9, %c0_10] : memref<1x768xf32, #tpu.memory_space<vmem>>, vector<1x768xf32>
    %19 = vector.broadcast %16 : vector<192x1xf32> to vector<192x768xf32>
    %20 = arith.mulf %8, %19 : vector<192x768xf32>
    %21 = vector.broadcast %17 : vector<1x768xf32> to vector<192x768xf32>
    %22 = arith.mulf %20, %21 : vector<192x768xf32>
    %23 = vector.broadcast %18 : vector<1x768xf32> to vector<192x768xf32>
    %24 = arith.addf %22, %23 : vector<192x768xf32>
    %c0_11 = arith.constant 0 : index
    %c0_12 = arith.constant 0 : index
    %25 = vector.load %arg5[%c0_11, %c0_12] : memref<192x768xf32, #tpu.memory_space<vmem>>, vector<192x768xf32>
    tpu.vector_store %arg5[%c0_11, %c0_12], %24 {strides = array<i32>} : memref<192x768xf32, #tpu.memory_space<vmem>>, vector<192x768xf32>,
    return
  }
  func.func @transform_0(%arg0: i32) -> (i32, i32) {
    %c0_i32 = arith.constant 0 : i32
    %c0_i32_0 = arith.constant 0 : i32
    return %arg0, %c0_i32 : i32, i32
  }
  func.func @transform_1(%arg0: i32) -> (i32, i32) {
    %c0_i32 = arith.constant 0 : i32
    %c0_i32_0 = arith.constant 0 : i32
    return %arg0, %c0_i32 : i32, i32
  }
  func.func @transform_2(%arg0: i32) -> (i32, i32) {
    %c0_i32 = arith.constant 0 : i32
    %c0_i32_0 = arith.constant 0 : i32
    %c0_i32_1 = arith.constant 0 : i32
    return %c0_i32, %c0_i32_0 : i32, i32
  }
  func.func @transform_3(%arg0: i32) -> (i32, i32) {
    %c0_i32 = arith.constant 0 : i32
    %c0_i32_0 = arith.constant 0 : i32
    %c0_i32_1 = arith.constant 0 : i32
    return %c0_i32, %c0_i32_0 : i32, i32
  }
  func.func @transform_4(%arg0: i32) -> (i32, i32) {
    %c0_i32 = arith.constant 0 : i32
    %c0_i32_0 = arith.constant 0 : i32
    return %arg0, %c0_i32 : i32, i32
  }
}

</mosaic_0001>

<llo_original>
// kernel: tpu_custom_call.1
$region0: #{tpu_custom_call.1}
  #allocation0 [shape = 'u32[]', space=smem, size = 0x4, offset = 0x4, fixed_abs, tag = 'smem constant byte address 0x4 - core index']
  #allocation1 [shape = 'u32[144,128]{1,0:T(1,128)}', space=vmem, size = 0x12000, scoped, tag = 'internal scratch']
  %s0 = inlined_call_operand.hbm [shape: f32[384,768], index: 0, kind: input, shape index: {}]
  %s1 = inlined_call_operand.hbm [shape: f32[384,768], index: 1, kind: input, shape index: {}]
  %s2 = inlined_call_operand.hbm [shape: f32[1,768], index: 2, kind: input, shape index: {}]
  %s3 = inlined_call_operand.hbm [shape: f32[1,768], index: 3, kind: input, shape index: {}]
  %s4 = inlined_call_operand.hbm [shape: f32[384,768], index: 4, kind: output, shape index: {}]
  %s5 = sld [smem:[#allocation0]]
  $region65: #{tpu_custom_call.1} parent=0
    _
  %s7 = ssub.s32 1, %s5
  %s8 = scalar_select 0, %s7, %s5
  $region1: #{tpu_custom_call.1} parent=0
    #allocation2 [shape = 'u8[1179648]{0}', space=vmem, size = 0x120000, scoped, tag = 'input window, operand 0']
    #allocation3 [shape = 's32[2]{0}', space=sflag, size = 0x8, scoped, tag = 'scoped memory for tpu_custom_call.1']
    #allocation4 [shape = 's32[2]{0}', space=sflag, size = 0x8, scoped, tag = 'scoped memory for tpu_custom_call.1']
    #allocation5 [shape = 'u8[1179648]{0}', space=vmem, size = 0x120000, scoped, tag = 'input window, operand 1']
    #allocation6 [shape = 's32[2]{0}', space=sflag, size = 0x8, scoped, tag = 'scoped memory for tpu_custom_call.1']
    #allocation7 [shape = 'u8[3072]{0}', space=vmem, size = 0xc00, scoped, tag = 'input window, operand 2, single buffered']
    #allocation8 [shape = 'u8[3072]{0}', space=vmem, size = 0xc00, scoped, tag = 'input window, operand 3, single buffered']
    #allocation9 [shape = 's32[1]{0}', space=sflag, size = 0x4, scoped, tag = 'scoped memory for tpu_custom_call.1']
    #allocation10 [shape = 'u8[1179648]{0}', space=vmem, size = 0x120000, scoped, tag = 'output window, operand 0']
    %9 = vsyncpa [#allocation3], 0
    %s10 = scalar_lea.sflag [#allocation3], 1
    %11 = vsyncpa %s10, 0
    %12 = vsyncpa [#allocation6], 0
    %s13 = scalar_lea.sflag [#allocation6], 1
    %14 = vsyncpa %s13, 0
    %15 = vsyncpa [#allocation9], 0
    %16 = vsyncpa [#allocation4], 0
    %s17 = scalar_lea.sflag [#allocation4], 1
    %18 = vsyncpa %s17, 0
    loop: start=0, step=1, limit=4
    $region2: #{tpu_custom_call.1} parent=1 // loop_pre_header
      _
    $region3: #{tpu_custom_call.1} parent=1 // loop_header
      %s20 = sphi 0, %s24
      %p21 = scmp.ge.s32.totalorder %s20, 4
      %s30 = sphi 0, %s32
      %s33 = sphi 0, %s30
      %s34 = sphi 0, %s33
      %s50 = sphi 0, %s34
      %s56 = sphi 0, %s58
      %s59 = sphi 0, %s56
      %s60 = sphi 0, %s59
      %s76 = sphi 0, %s60
      %s80 = sphi 0, %s80
      %s82 = sphi 0, %s80
      %s83 = sphi 0, %s82
      %s97 = sphi 0, %s83
      %s101 = sphi 0, %s101
      %s103 = sphi 0, %s101
      %s104 = sphi 0, %s103
      %s118 = sphi 0, %s104
      %s124 = sphi 0, %s126
      %s127 = sphi 0, %s124
      %s128 = sphi 0, %s127
      %s144 = sphi 0, %s128
    $region4: #{tpu_custom_call.1} parent=1 // loop_header_branch
      %23 = sbr.rel (%p21) target = $region8
    $region5: #{tpu_custom_call.1} parent=1 // loop_body
      %s25 = ssub.s32 %s20, 1
      %s26 = ssub.s32 %s20, 2
      %s27 = sadd.s32 %s20, 1
      %s28 = ssub.s32 %s20, %s27
      %p29 = scmp.eq.s32.totalorder %s28, 0
      %s31 = sadd.s32 %s30, 1
      %s32 = scalar_select %p29, %s30, %s31
      %p35 = pneg %p29
      %p36 = scmp.eq.s32.totalorder %s20, 1
      %p37 = por %p35, %p36
      %p38 = scmp.ne.s32.totalorder %s30, %s33
      %p39 = scmp.eq.s32.totalorder %s20, 0
      %p40 = por %p38, %p39
      %p41 = scmp.ne.s32.totalorder %s30, %s33
      %p42 = scmp.eq.s32.totalorder %s25, 1
      %p43 = por %p41, %p42
      %p44 = scmp.ne.s32.totalorder %s33, %s34
      %p45 = scmp.eq.s32.totalorder %s25, 0
      %p46 = por %p44, %p45
      %p47 = scmp.ne.s32.totalorder %s33, %s34
      %p48 = scmp.eq.s32.totalorder %s26, 1
      %p49 = por %p47, %p48
      %p51 = scmp.ne.s32.totalorder %s34, %s50
      %p52 = scmp.eq.s32.totalorder %s26, 0
      %p53 = por %p51, %p52
      %s54 = ssub.s32 %s20, %s27
      %p55 = scmp.eq.s32.totalorder %s54, 0
      %s57 = sadd.s32 %s56, 1
      %s58 = scalar_select %p55, %s56, %s57
      %p61 = pneg %p55
      %p62 = scmp.eq.s32.totalorder %s20, 1
      %p63 = por %p61, %p62
      %p64 = scmp.ne.s32.totalorder %s56, %s59
      %p65 = scmp.eq.s32.totalorder %s20, 0
      %p66 = por %p64, %p65
      %p67 = scmp.ne.s32.totalorder %s56, %s59
      %p68 = scmp.eq.s32.totalorder %s25, 1
      %p69 = por %p67, %p68
      %p70 = scmp.ne.s32.totalorder %s59, %s60
      %p71 = scmp.eq.s32.totalorder %s25, 0
      %p72 = por %p70, %p71
      %p73 = scmp.ne.s32.totalorder %s59, %s60
      %p74 = scmp.eq.s32.totalorder %s26, 1
      %p75 = por %p73, %p74
      %p77 = scmp.ne.s32.totalorder %s60, %s76
      %p78 = scmp.eq.s32.totalorder %s26, 0
      %p79 = por %p77, %p78
      %s81 = sadd.s32 %s80, 1
      %p84 = scmp.eq.s32.totalorder %s20, 1
      %p85 = scmp.ne.s32.totalorder %s80, %s82
      %p86 = scmp.eq.s32.totalorder %s20, 0
      %p87 = por %p85, %p86
      %p88 = scmp.ne.s32.totalorder %s80, %s82
      %p89 = scmp.eq.s32.totalorder %s25, 1
      %p90 = por %p88, %p89
      %p91 = scmp.ne.s32.totalorder %s82, %s83
      %p92 = scmp.eq.s32.totalorder %s25, 0
      %p93 = por %p91, %p92
      %p94 = scmp.ne.s32.totalorder %s82, %s83
      %p95 = scmp.eq.s32.totalorder %s26, 1
      %p96 = por %p94, %p95
      %p98 = scmp.ne.s32.totalorder %s83, %s97
      %p99 = scmp.eq.s32.totalorder %s26, 0
      %p100 = por %p98, %p99
      %s102 = sadd.s32 %s101, 1
      %p105 = scmp.eq.s32.totalorder %s20, 1
      %p106 = scmp.ne.s32.totalorder %s101, %s103
      %p107 = scmp.eq.s32.totalorder %s20, 0
      %p108 = por %p106, %p107
      %p109 = scmp.ne.s32.totalorder %s101, %s103
      %p110 = scmp.eq.s32.totalorder %s25, 1
      %p111 = por %p109, %p110
      %p112 = scmp.ne.s32.totalorder %s103, %s104
      %p113 = scmp.eq.s32.totalorder %s25, 0
      %p114 = por %p112, %p113
      %p115 = scmp.ne.s32.totalorder %s103, %s104
      %p116 = scmp.eq.s32.totalorder %s26, 1
      %p117 = por %p115, %p116
      %p119 = scmp.ne.s32.totalorder %s104, %s118
      %p120 = scmp.eq.s32.totalorder %s26, 0
      %p121 = por %p119, %p120
      %s122 = ssub.s32 %s20, %s27
      %p123 = scmp.eq.s32.totalorder %s122, 0
      %s125 = sadd.s32 %s124, 1
      %s126 = scalar_select %p123, %s124, %s125
      %p129 = pneg %p123
      %p130 = scmp.eq.s32.totalorder %s20, 1
      %p131 = por %p129, %p130
      %p132 = scmp.ne.s32.totalorder %s124, %s127
      %p133 = scmp.eq.s32.totalorder %s20, 0
      %p134 = por %p132, %p133
      %p135 = scmp.ne.s32.totalorder %s124, %s127
      %p136 = scmp.eq.s32.totalorder %s25, 1
      %p137 = por %p135, %p136
      %p138 = scmp.ne.s32.totalorder %s127, %s128
      %p139 = scmp.eq.s32.totalorder %s25, 0
      %p140 = por %p138, %p139
      %p141 = scmp.ne.s32.totalorder %s127, %s128
      %p142 = scmp.eq.s32.totalorder %s26, 1
      %p143 = por %p141, %p142
      %p145 = scmp.ne.s32.totalorder %s128, %s144
      %p146 = scmp.eq.s32.totalorder %s26, 0
      %p147 = por %p145, %p146
      %p148 = scmp.le.s32.totalorder 1, %s20
      %p149 = scmp.lt.s32.totalorder %s20, 3
      %p150 = pnand %p148, %p149
      %p151 = pneg %p150
      // Predicated region
      $region9: #{tpu_custom_call.1} parent=5 // pred_check
        _
      $region10: #{tpu_custom_call.1} parent=5 // pred_check_branch
        %153 = sbr.rel (%p150) target = $region12
      $region11: #{tpu_custom_call.1} parent=5 // pred_region
        %s154 = ssub.s32 %s20, 1
        // Predicated region
        $region13: #{tpu_custom_call.1} parent=11 // pred_check
          %p155 = pneg %p93
        $region14: #{tpu_custom_call.1} parent=11 // pred_check_branch
          %157 = sbr.rel (%p155) target = $region16
        $region15: #{tpu_custom_call.1} parent=11 // pred_region
          %s159 = ssub.s32 96, 96
          %160 = vsyncadd [#allocation6], %s159
          %s162 = sshll.u32 [#allocation7], 4
          %s163 = int_to_ptr.vmem [resolvable:$true] %s162
          %165 = dma.hbm_to_vmem [thread:$0]  %s2, 96, %s163, [#allocation6]
        $region16: #{tpu_custom_call.1} parent=11 // pred_fallthru
          _
        // Predicated region
        $region17: #{tpu_custom_call.1} parent=11 // pred_check
          %p166 = pneg %p114
        $region18: #{tpu_custom_call.1} parent=11 // pred_check_branch
          %168 = sbr.rel (%p166) target = $region20
        $region19: #{tpu_custom_call.1} parent=11 // pred_region
          %s170 = ssub.s32 96, 96
          %171 = vsyncadd [#allocation9], %s170
          %s173 = sshll.u32 [#allocation8], 4
          %s174 = int_to_ptr.vmem [resolvable:$true] %s173
          %176 = dma.hbm_to_vmem [thread:$0]  %s3, 96, %s174, [#allocation9]
        $region20: #{tpu_custom_call.1} parent=11 // pred_fallthru
          _
      $region12: #{tpu_custom_call.1} parent=5 // pred_fallthru
        _
      %p177 = scmp.lt.s32.totalorder %s20, 2
      // Predicated region
      $region21: #{tpu_custom_call.1} parent=5 // pred_check
        %p178 = pneg %p177
      $region22: #{tpu_custom_call.1} parent=5 // pred_check_branch
        %180 = sbr.rel (%p178) target = $region24
      $region23: #{tpu_custom_call.1} parent=5 // pred_region
        // Predicated region
        $region25: #{tpu_custom_call.1} parent=23 // pred_check
          %p181 = pneg %p40
        $region26: #{tpu_custom_call.1} parent=23 // pred_check_branch
          %183 = sbr.rel (%p181) target = $region28
        $region27: #{tpu_custom_call.1} parent=23 // pred_region
          %s184 = sand.u32 %s30, 1
          %s185 = scalar_lea.sflag [#allocation3], %s184
          %s186 = sand.u32 %s30, 1
          %s187 = smul.addr %s186, 1152
          %s188 = scalar_lea.vmem [#allocation2], %s187
          %s189 = smul.u32 24, %s20
          %s191 = ssub.s32 18432, 18432
          %192 = vsyncadd %s185, %s191
          %s193 = smul.addr %s189, 6
          %s194 = smul.addr %s193, 128
          %s195 = scalar_lea.hbm %s0, %s194
          %s196 = sshll.u32 %s188, 4
          %s197 = int_to_ptr.vmem [resolvable:$true] %s196
          %202 = dma.hbm_to_vmem [thread:$0]  %s195, 18432, %s197, %s185, 768, 768, 48
        $region28: #{tpu_custom_call.1} parent=23 // pred_fallthru
          _
        // Predicated region
        $region29: #{tpu_custom_call.1} parent=23 // pred_check
          %p203 = pneg %p66
        $region30: #{tpu_custom_call.1} parent=23 // pred_check_branch
          %205 = sbr.rel (%p203) target = $region32
        $region31: #{tpu_custom_call.1} parent=23 // pred_region
          %s206 = sand.u32 %s20, 1
          %s207 = scalar_lea.sflag [#allocation6], %s206
          %s208 = sand.u32 %s56, 1
          %s209 = smul.addr %s208, 1152
          %s210 = scalar_lea.vmem [#allocation5], %s209
          %s211 = smul.u32 24, %s20
          %s213 = ssub.s32 18432, 18432
          %214 = vsyncadd %s207, %s213
          %s215 = smul.addr %s211, 6
          %s216 = smul.addr %s215, 128
          %s217 = scalar_lea.hbm %s1, %s216
          %s218 = sshll.u32 %s210, 4
          %s219 = int_to_ptr.vmem [resolvable:$true] %s218
          %224 = dma.hbm_to_vmem [thread:$0]  %s217, 18432, %s219, %s207, 768, 768, 48
        $region32: #{tpu_custom_call.1} parent=23 // pred_fallthru
          _
      $region24: #{tpu_custom_call.1} parent=5 // pred_fallthru
        _
      %p225 = scmp.le.s32.totalorder 1, %s20
      %p226 = scmp.lt.s32.totalorder %s20, 3
      %p227 = pnand %p225, %p226
      %p228 = pneg %p227
      // Predicated region
      $region33: #{tpu_custom_call.1} parent=5 // pred_check
        _
      $region34: #{tpu_custom_call.1} parent=5 // pred_check_branch
        %230 = sbr.rel (%p227) target = $region36
      $region35: #{tpu_custom_call.1} parent=5 // pred_region
        %s231 = ssub.s32 %s20, 1
        %s232 = sand.u32 %s33, 1
        %s233 = scalar_lea.sflag [#allocation3], %s232
        %s234 = sand.u32 %s33, 1
        %s235 = smul.addr %s234, 1152
        %s236 = scalar_lea.vmem [#allocation2], %s235
        // Predicated region
        $region37: #{tpu_custom_call.1} parent=35 // pred_check
          %p237 = pneg %p46
        $region38: #{tpu_custom_call.1} parent=35 // pred_check_branch
          %239 = sbr.rel (%p237) target = $region40
        $region39: #{tpu_custom_call.1} parent=35 // pred_region
          %240 = dma.done %s233, 18432
        $region40: #{tpu_custom_call.1} parent=35 // pred_fallthru
          _
        %s241 = sand.u32 %s25, 1
        %s242 = scalar_lea.sflag [#allocation6], %s241
        %s243 = sand.u32 %s59, 1
        %s244 = smul.addr %s243, 1152
        %s245 = scalar_lea.vmem [#allocation5], %s244
        // Predicated region
        $region41: #{tpu_custom_call.1} parent=35 // pred_check
          %p246 = pneg %p72
        $region42: #{tpu_custom_call.1} parent=35 // pred_check_branch
          %248 = sbr.rel (%p246) target = $region44
        $region43: #{tpu_custom_call.1} parent=35 // pred_region
          %249 = dma.done %s242, 18432
        $region44: #{tpu_custom_call.1} parent=35 // pred_fallthru
          _
        // Predicated region
        $region45: #{tpu_custom_call.1} parent=35 // pred_check
          %p250 = pneg %p93
        $region46: #{tpu_custom_call.1} parent=35 // pred_check_branch
          %252 = sbr.rel (%p250) target = $region48
        $region47: #{tpu_custom_call.1} parent=35 // pred_region
          %253 = dma.done [#allocation6], 96
        $region48: #{tpu_custom_call.1} parent=35 // pred_fallthru
          _
        // Predicated region
        $region49: #{tpu_custom_call.1} parent=35 // pred_check
          %p254 = pneg %p114
        $region50: #{tpu_custom_call.1} parent=35 // pred_check_branch
          %256 = sbr.rel (%p254) target = $region52
        $region51: #{tpu_custom_call.1} parent=35 // pred_region
          %257 = dma.done [#allocation9], 96
        $region52: #{tpu_custom_call.1} parent=35 // pred_fallthru
          _
        %s258 = sand.u32 %s33, 1
        %s259 = scalar_lea.sflag [#allocation3], %s258
        %s260 = sand.u32 %s33, 1
        %s261 = smul.addr %s260, 1152
        %s262 = scalar_lea.vmem [#allocation2], %s261
        %p263 = pneg %p46
        %p264 = pneg %p43
        %s265 = sand.u32 %s25, 1
        %s266 = scalar_lea.sflag [#allocation6], %s265
        %s267 = sand.u32 %s59, 1
        %s268 = smul.addr %s267, 1152
        %s269 = scalar_lea.vmem [#allocation5], %s268
        %p270 = pneg %p72
        %p271 = pneg %p69
        %p272 = pneg %p93
        %p273 = pneg %p90
        %p274 = pneg %p114
        %p275 = pneg %p111
        %p276 = pneg %p140
        %p277 = pneg %p137
        %s278 = sand.u32 %s127, 1
        %s279 = scalar_lea.sflag [#allocation4], %s278
        %s280 = sand.u32 %s127, 1
        %s281 = smul.addr %s280, 1152
        %s282 = scalar_lea.vmem [#allocation10], %s281
        %s283 = smul.u32 24, %s25
        %s284 = smul.u32 24, %s25
        %s285 = smul.u32 24, %s25
        %v286 = vld [vmem:[%s236] sm:$0xff]
        %v287 = vld [vmem:[%s236 + $0x8] sm:$0xff]
        %v288 = vld [vmem:[%s236 + $0x10] sm:$0xff]
        %v289 = vld [vmem:[%s236 + $0x18] sm:$0xff]
        %v290 = vld [vmem:[%s236 + $0x20] sm:$0xff]
        %v291 = vld [vmem:[%s236 + $0x28] sm:$0xff]
        %v292 = vld [vmem:[%s236 + $0x30] sm:$0xff]
        %v293 = vld [vmem:[%s236 + $0x38] sm:$0xff]
        %v294 = vld [vmem:[%s236 + $0x40] sm:$0xff]
        %v295 = vld [vmem:[%s236 + $0x48] sm:$0xff]
        %v296 = vld [vmem:[%s236 + $0x50] sm:$0xff]
        %v297 = vld [vmem:[%s236 + $0x58] sm:$0xff]
        %v298 = vld [vmem:[%s236 + $0x60] sm:$0xff]
        %v299 = vld [vmem:[%s236 + $0x68] sm:$0xff]
        %v300 = vld [vmem:[%s236 + $0x70] sm:$0xff]
        %v301 = vld [vmem:[%s236 + $0x78] sm:$0xff]
        %v302 = vld [vmem:[%s236 + $0x80] sm:$0xff]
        %v303 = vld [vmem:[%s236 + $0x88] sm:$0xff]
        %v304 = vld [vmem:[%s236 + $0x90] sm:$0xff]
        %v305 = vld [vmem:[%s236 + $0x98] sm:$0xff]
        %v306 = vld [vmem:[%s236 + $0xa0] sm:$0xff]
        %v307 = vld [vmem:[%s236 + $0xa8] sm:$0xff]
        %v308 = vld [vmem:[%s236 + $0xb0] sm:$0xff]
        %v309 = vld [vmem:[%s236 + $0xb8] sm:$0xff]
        %v310 = vld [vmem:[%s236 + $0xc0] sm:$0xff]
        %v311 = vld [vmem:[%s236 + $0xc8] sm:$0xff]
        %v312 = vld [vmem:[%s236 + $0xd0] sm:$0xff]
        %v313 = vld [vmem:[%s236 + $0xd8] sm:$0xff]
        %v314 = vld [vmem:[%s236 + $0xe0] sm:$0xff]
        %v315 = vld [vmem:[%s236 + $0xe8] sm:$0xff]
        %v316 = vld [vmem:[%s236 + $0xf0] sm:$0xff]
        %v317 = vld [vmem:[%s236 + $0xf8] sm:$0xff]
        %v318 = vld [vmem:[%s236 + $0x100] sm:$0xff]
        %v319 = vld [vmem:[%s236 + $0x108] sm:$0xff]
        %v320 = vld [vmem:[%s236 + $0x110] sm:$0xff]
        %v321 = vld [vmem:[%s236 + $0x118] sm:$0xff]
        %v322 = vld [vmem:[%s236 + $0x120] sm:$0xff]
        %v323 = vld [vmem:[%s236 + $0x128] sm:$0xff]
        %v324 = vld [vmem:[%s236 + $0x130] sm:$0xff]
        %v325 = vld [vmem:[%s236 + $0x138] sm:$0xff]
        %v326 = vld [vmem:[%s236 + $0x140] sm:$0xff]
        %v327 = vld [vmem:[%s236 + $0x148] sm:$0xff]
        %v328 = vld [vmem:[%s236 + $0x150] sm:$0xff]
        %v329 = vld [vmem:[%s236 + $0x158] sm:$0xff]
        %v330 = vld [vmem:[%s236 + $0x160] sm:$0xff]
        %v331 = vld [vmem:[%s236 + $0x168] sm:$0xff]
        %v332 = vld [vmem:[%s236 + $0x170] sm:$0xff]
        %v333 = vld [vmem:[%s236 + $0x178] sm:$0xff]
        %v334 = vld [vmem:[%s236 + $0x180] sm:$0xff]
        %v335 = vld [vmem:[%s236 + $0x188] sm:$0xff]
        %v336 = vld [vmem:[%s236 + $0x190] sm:$0xff]
        %v337 = vld [vmem:[%s236 + $0x198] sm:$0xff]
        %v338 = vld [vmem:[%s236 + $0x1a0] sm:$0xff]
        %v339 = vld [vmem:[%s236 + $0x1a8] sm:$0xff]
        %v340 = vld [vmem:[%s236 + $0x1b0] sm:$0xff]
        %v341 = vld [vmem:[%s236 + $0x1b8] sm:$0xff]
        %v342 = vld [vmem:[%s236 + $0x1c0] sm:$0xff]
        %v343 = vld [vmem:[%s236 + $0x1c8] sm:$0xff]
        %v344 = vld [vmem:[%s236 + $0x1d0] sm:$0xff]
        %v345 = vld [vmem:[%s236 + $0x1d8] sm:$0xff]
        %v346 = vld [vmem:[%s236 + $0x1e0] sm:$0xff]
        %v347 = vld [vmem:[%s236 + $0x1e8] sm:$0xff]
        %v348 = vld [vmem:[%s236 + $0x1f0] sm:$0xff]
        %v349 = vld [vmem:[%s236 + $0x1f8] sm:$0xff]
        %v350 = vld [vmem:[%s236 + $0x200] sm:$0xff]
        %v351 = vld [vmem:[%s236 + $0x208] sm:$0xff]
        %v352 = vld [vmem:[%s236 + $0x210] sm:$0xff]
        %v353 = vld [vmem:[%s236 + $0x218] sm:$0xff]
        %v354 = vld [vmem:[%s236 + $0x220] sm:$0xff]
        %v355 = vld [vmem:[%s236 + $0x228] sm:$0xff]
        %v356 = vld [vmem:[%s236 + $0x230] sm:$0xff]
        %v357 = vld [vmem:[%s236 + $0x238] sm:$0xff]
        %v358 = vld [vmem:[%s236 + $0x240] sm:$0xff]
        %v359 = vld [vmem:[%s236 + $0x248] sm:$0xff]
        %v360 = vld [vmem:[%s236 + $0x250] sm:$0xff]
        %v361 = vld [vmem:[%s236 + $0x258] sm:$0xff]
        %v362 = vld [vmem:[%s236 + $0x260] sm:$0xff]
        %v363 = vld [vmem:[%s236 + $0x268] sm:$0xff]
        %v364 = vld [vmem:[%s236 + $0x270] sm:$0xff]
        %v365 = vld [vmem:[%s236 + $0x278] sm:$0xff]
        %v366 = vld [vmem:[%s236 + $0x280] sm:$0xff]
        %v367 = vld [vmem:[%s236 + $0x288] sm:$0xff]
        %v368 = vld [vmem:[%s236 + $0x290] sm:$0xff]
        %v369 = vld [vmem:[%s236 + $0x298] sm:$0xff]
        %v370 = vld [vmem:[%s236 + $0x2a0] sm:$0xff]
        %v371 = vld [vmem:[%s236 + $0x2a8] sm:$0xff]
        %v372 = vld [vmem:[%s236 + $0x2b0] sm:$0xff]
        %v373 = vld [vmem:[%s236 + $0x2b8] sm:$0xff]
        %v374 = vld [vmem:[%s236 + $0x2c0] sm:$0xff]
        %v375 = vld [vmem:[%s236 + $0x2c8] sm:$0xff]
        %v376 = vld [vmem:[%s236 + $0x2d0] sm:$0xff]
        %v377 = vld [vmem:[%s236 + $0x2d8] sm:$0xff]
        %v378 = vld [vmem:[%s236 + $0x2e0] sm:$0xff]
        %v379 = vld [vmem:[%s236 + $0x2e8] sm:$0xff]
        %v380 = vld [vmem:[%s236 + $0x2f0] sm:$0xff]
        %v381 = vld [vmem:[%s236 + $0x2f8] sm:$0xff]
        %v382 = vld [vmem:[%s236 + $0x300] sm:$0xff]
        %v383 = vld [vmem:[%s236 + $0x308] sm:$0xff]
        %v384 = vld [vmem:[%s236 + $0x310] sm:$0xff]
        %v385 = vld [vmem:[%s236 + $0x318] sm:$0xff]
        %v386 = vld [vmem:[%s236 + $0x320] sm:$0xff]
        %v387 = vld [vmem:[%s236 + $0x328] sm:$0xff]
        %v388 = vld [vmem:[%s236 + $0x330] sm:$0xff]
        %v389 = vld [vmem:[%s236 + $0x338] sm:$0xff]
        %v390 = vld [vmem:[%s236 + $0x340] sm:$0xff]
        %v391 = vld [vmem:[%s236 + $0x348] sm:$0xff]
        %v392 = vld [vmem:[%s236 + $0x350] sm:$0xff]
        %v393 = vld [vmem:[%s236 + $0x358] sm:$0xff]
        %v394 = vld [vmem:[%s236 + $0x360] sm:$0xff]
        %v395 = vld [vmem:[%s236 + $0x368] sm:$0xff]
        %v396 = vld [vmem:[%s236 + $0x370] sm:$0xff]
        %v397 = vld [vmem:[%s236 + $0x378] sm:$0xff]
        %v398 = vld [vmem:[%s236 + $0x380] sm:$0xff]
        %v399 = vld [vmem:[%s236 + $0x388] sm:$0xff]
        %v400 = vld [vmem:[%s236 + $0x390] sm:$0xff]
        %v401 = vld [vmem:[%s236 + $0x398] sm:$0xff]
        %v402 = vld [vmem:[%s236 + $0x3a0] sm:$0xff]
        %v403 = vld [vmem:[%s236 + $0x3a8] sm:$0xff]
        %v404 = vld [vmem:[%s236 + $0x3b0] sm:$0xff]
        %v405 = vld [vmem:[%s236 + $0x3b8] sm:$0xff]
        %v406 = vld [vmem:[%s236 + $0x3c0] sm:$0xff]
        %v407 = vld [vmem:[%s236 + $0x3c8] sm:$0xff]
        %v408 = vld [vmem:[%s236 + $0x3d0] sm:$0xff]
        %v409 = vld [vmem:[%s236 + $0x3d8] sm:$0xff]
        %v410 = vld [vmem:[%s236 + $0x3e0] sm:$0xff]
        %v411 = vld [vmem:[%s236 + $0x3e8] sm:$0xff]
        %v412 = vld [vmem:[%s236 + $0x3f0] sm:$0xff]
        %v413 = vld [vmem:[%s236 + $0x3f8] sm:$0xff]
        %v414 = vld [vmem:[%s236 + $0x400] sm:$0xff]
        %v415 = vld [vmem:[%s236 + $0x408] sm:$0xff]
        %v416 = vld [vmem:[%s236 + $0x410] sm:$0xff]
        %v417 = vld [vmem:[%s236 + $0x418] sm:$0xff]
        %v418 = vld [vmem:[%s236 + $0x420] sm:$0xff]
        %v419 = vld [vmem:[%s236 + $0x428] sm:$0xff]
        %v420 = vld [vmem:[%s236 + $0x430] sm:$0xff]
        %v421 = vld [vmem:[%s236 + $0x438] sm:$0xff]
        %v422 = vld [vmem:[%s236 + $0x440] sm:$0xff]
        %v423 = vld [vmem:[%s236 + $0x448] sm:$0xff]
        %v424 = vld [vmem:[%s236 + $0x450] sm:$0xff]
        %v425 = vld [vmem:[%s236 + $0x458] sm:$0xff]
        %v426 = vld [vmem:[%s236 + $0x460] sm:$0xff]
        %v427 = vld [vmem:[%s236 + $0x468] sm:$0xff]
        %v428 = vld [vmem:[%s236 + $0x470] sm:$0xff]
        %v429 = vld [vmem:[%s236 + $0x478] sm:$0xff]
        %v430 = vld [vmem:[%s245] sm:$0xff]
        %v431 = vld [vmem:[%s245 + $0x8] sm:$0xff]
        %v432 = vld [vmem:[%s245 + $0x10] sm:$0xff]
        %v433 = vld [vmem:[%s245 + $0x18] sm:$0xff]
        %v434 = vld [vmem:[%s245 + $0x20] sm:$0xff]
        %v435 = vld [vmem:[%s245 + $0x28] sm:$0xff]
        %v436 = vld [vmem:[%s245 + $0x30] sm:$0xff]
        %v437 = vld [vmem:[%s245 + $0x38] sm:$0xff]
        %v438 = vld [vmem:[%s245 + $0x40] sm:$0xff]
        %v439 = vld [vmem:[%s245 + $0x48] sm:$0xff]
        %v440 = vld [vmem:[%s245 + $0x50] sm:$0xff]
        %v441 = vld [vmem:[%s245 + $0x58] sm:$0xff]
        %v442 = vld [vmem:[%s245 + $0x60] sm:$0xff]
        %v443 = vld [vmem:[%s245 + $0x68] sm:$0xff]
        %v444 = vld [vmem:[%s245 + $0x70] sm:$0xff]
        %v445 = vld [vmem:[%s245 + $0x78] sm:$0xff]
        %v446 = vld [vmem:[%s245 + $0x80] sm:$0xff]
        %v447 = vld [vmem:[%s245 + $0x88] sm:$0xff]
        %v448 = vld [vmem:[%s245 + $0x90] sm:$0xff]
        %v449 = vld [vmem:[%s245 + $0x98] sm:$0xff]
        %v450 = vld [vmem:[%s245 + $0xa0] sm:$0xff]
        %v451 = vld [vmem:[%s245 + $0xa8] sm:$0xff]
        %v452 = vld [vmem:[%s245 + $0xb0] sm:$0xff]
        %v453 = vld [vmem:[%s245 + $0xb8] sm:$0xff]
        %v454 = vld [vmem:[%s245 + $0xc0] sm:$0xff]
        %v455 = vld [vmem:[%s245 + $0xc8] sm:$0xff]
        %v456 = vld [vmem:[%s245 + $0xd0] sm:$0xff]
        %v457 = vld [vmem:[%s245 + $0xd8] sm:$0xff]
        %v458 = vld [vmem:[%s245 + $0xe0] sm:$0xff]
        %v459 = vld [vmem:[%s245 + $0xe8] sm:$0xff]
        %v460 = vld [vmem:[%s245 + $0xf0] sm:$0xff]
        %v461 = vld [vmem:[%s245 + $0xf8] sm:$0xff]
        %v462 = vld [vmem:[%s245 + $0x100] sm:$0xff]
        %v463 = vld [vmem:[%s245 + $0x108] sm:$0xff]
        %v464 = vld [vmem:[%s245 + $0x110] sm:$0xff]
        %v465 = vld [vmem:[%s245 + $0x118] sm:$0xff]
        %v466 = vld [vmem:[%s245 + $0x120] sm:$0xff]
        %v467 = vld [vmem:[%s245 + $0x128] sm:$0xff]
        %v468 = vld [vmem:[%s245 + $0x130] sm:$0xff]
        %v469 = vld [vmem:[%s245 + $0x138] sm:$0xff]
        %v470 = vld [vmem:[%s245 + $0x140] sm:$0xff]
        %v471 = vld [vmem:[%s245 + $0x148] sm:$0xff]
        %v472 = vld [vmem:[%s245 + $0x150] sm:$0xff]
        %v473 = vld [vmem:[%s245 + $0x158] sm:$0xff]
        %v474 = vld [vmem:[%s245 + $0x160] sm:$0xff]
        %v475 = vld [vmem:[%s245 + $0x168] sm:$0xff]
        %v476 = vld [vmem:[%s245 + $0x170] sm:$0xff]
        %v477 = vld [vmem:[%s245 + $0x178] sm:$0xff]
        %v478 = vld [vmem:[%s245 + $0x180] sm:$0xff]
        %v479 = vld [vmem:[%s245 + $0x188] sm:$0xff]
        %v480 = vld [vmem:[%s245 + $0x190] sm:$0xff]
        %v481 = vld [vmem:[%s245 + $0x198] sm:$0xff]
        %v482 = vld [vmem:[%s245 + $0x1a0] sm:$0xff]
        %v483 = vld [vmem:[%s245 + $0x1a8] sm:$0xff]
        %v484 = vld [vmem:[%s245 + $0x1b0] sm:$0xff]
        %v485 = vld [vmem:[%s245 + $0x1b8] sm:$0xff]
        %v486 = vld [vmem:[%s245 + $0x1c0] sm:$0xff]
        %v487 = vld [vmem:[%s245 + $0x1c8] sm:$0xff]
        %v488 = vld [vmem:[%s245 + $0x1d0] sm:$0xff]
        %v489 = vld [vmem:[%s245 + $0x1d8] sm:$0xff]
        %v490 = vld [vmem:[%s245 + $0x1e0] sm:$0xff]
        %v491 = vld [vmem:[%s245 + $0x1e8] sm:$0xff]
        %v492 = vld [vmem:[%s245 + $0x1f0] sm:$0xff]
        %v493 = vld [vmem:[%s245 + $0x1f8] sm:$0xff]
        %v494 = vld [vmem:[%s245 + $0x200] sm:$0xff]
        %v495 = vld [vmem:[%s245 + $0x208] sm:$0xff]
        %v496 = vld [vmem:[%s245 + $0x210] sm:$0xff]
        %v497 = vld [vmem:[%s245 + $0x218] sm:$0xff]
        %v498 = vld [vmem:[%s245 + $0x220] sm:$0xff]
        %v499 = vld [vmem:[%s245 + $0x228] sm:$0xff]
        %v500 = vld [vmem:[%s245 + $0x230] sm:$0xff]
        %v501 = vld [vmem:[%s245 + $0x238] sm:$0xff]
        %v502 = vld [vmem:[%s245 + $0x240] sm:$0xff]
        %v503 = vld [vmem:[%s245 + $0x248] sm:$0xff]
        %v504 = vld [vmem:[%s245 + $0x250] sm:$0xff]
        %v505 = vld [vmem:[%s245 + $0x258] sm:$0xff]
        %v506 = vld [vmem:[%s245 + $0x260] sm:$0xff]
        %v507 = vld [vmem:[%s245 + $0x268] sm:$0xff]
        %v508 = vld [vmem:[%s245 + $0x270] sm:$0xff]
        %v509 = vld [vmem:[%s245 + $0x278] sm:$0xff]
        %v510 = vld [vmem:[%s245 + $0x280] sm:$0xff]
        %v511 = vld [vmem:[%s245 + $0x288] sm:$0xff]
        %v512 = vld [vmem:[%s245 + $0x290] sm:$0xff]
        %v513 = vld [vmem:[%s245 + $0x298] sm:$0xff]
        %v514 = vld [vmem:[%s245 + $0x2a0] sm:$0xff]
        %v515 = vld [vmem:[%s245 + $0x2a8] sm:$0xff]
        %v516 = vld [vmem:[%s245 + $0x2b0] sm:$0xff]
        %v517 = vld [vmem:[%s245 + $0x2b8] sm:$0xff]
        %v518 = vld [vmem:[%s245 + $0x2c0] sm:$0xff]
        %v519 = vld [vmem:[%s245 + $0x2c8] sm:$0xff]
        %v520 = vld [vmem:[%s245 + $0x2d0] sm:$0xff]
        %v521 = vld [vmem:[%s245 + $0x2d8] sm:$0xff]
        %v522 = vld [vmem:[%s245 + $0x2e0] sm:$0xff]
        %v523 = vld [vmem:[%s245 + $0x2e8] sm:$0xff]
        %v524 = vld [vmem:[%s245 + $0x2f0] sm:$0xff]
        %v525 = vld [vmem:[%s245 + $0x2f8] sm:$0xff]
        %v526 = vld [vmem:[%s245 + $0x300] sm:$0xff]
        %v527 = vld [vmem:[%s245 + $0x308] sm:$0xff]
        %v528 = vld [vmem:[%s245 + $0x310] sm:$0xff]
        %v529 = vld [vmem:[%s245 + $0x318] sm:$0xff]
        %v530 = vld [vmem:[%s245 + $0x320] sm:$0xff]
        %v531 = vld [vmem:[%s245 + $0x328] sm:$0xff]
        %v532 = vld [vmem:[%s245 + $0x330] sm:$0xff]
        %v533 = vld [vmem:[%s245 + $0x338] sm:$0xff]
        %v534 = vld [vmem:[%s245 + $0x340] sm:$0xff]
        %v535 = vld [vmem:[%s245 + $0x348] sm:$0xff]
        %v536 = vld [vmem:[%s245 + $0x350] sm:$0xff]
        %v537 = vld [vmem:[%s245 + $0x358] sm:$0xff]
        %v538 = vld [vmem:[%s245 + $0x360] sm:$0xff]
        %v539 = vld [vmem:[%s245 + $0x368] sm:$0xff]
        %v540 = vld [vmem:[%s245 + $0x370] sm:$0xff]
        %v541 = vld [vmem:[%s245 + $0x378] sm:$0xff]
        %v542 = vld [vmem:[%s245 + $0x380] sm:$0xff]
        %v543 = vld [vmem:[%s245 + $0x388] sm:$0xff]
        %v544 = vld [vmem:[%s245 + $0x390] sm:$0xff]
        %v545 = vld [vmem:[%s245 + $0x398] sm:$0xff]
        %v546 = vld [vmem:[%s245 + $0x3a0] sm:$0xff]
        %v547 = vld [vmem:[%s245 + $0x3a8] sm:$0xff]
        %v548 = vld [vmem:[%s245 + $0x3b0] sm:$0xff]
        %v549 = vld [vmem:[%s245 + $0x3b8] sm:$0xff]
        %v550 = vld [vmem:[%s245 + $0x3c0] sm:$0xff]
        %v551 = vld [vmem:[%s245 + $0x3c8] sm:$0xff]
        %v552 = vld [vmem:[%s245 + $0x3d0] sm:$0xff]
        %v553 = vld [vmem:[%s245 + $0x3d8] sm:$0xff]
        %v554 = vld [vmem:[%s245 + $0x3e0] sm:$0xff]
        %v555 = vld [vmem:[%s245 + $0x3e8] sm:$0xff]
        %v556 = vld [vmem:[%s245 + $0x3f0] sm:$0xff]
        %v557 = vld [vmem:[%s245 + $0x3f8] sm:$0xff]
        %v558 = vld [vmem:[%s245 + $0x400] sm:$0xff]
        %v559 = vld [vmem:[%s245 + $0x408] sm:$0xff]
        %v560 = vld [vmem:[%s245 + $0x410] sm:$0xff]
        %v561 = vld [vmem:[%s245 + $0x418] sm:$0xff]
        %v562 = vld [vmem:[%s245 + $0x420] sm:$0xff]
        %v563 = vld [vmem:[%s245 + $0x428] sm:$0xff]
        %v564 = vld [vmem:[%s245 + $0x430] sm:$0xff]
        %v565 = vld [vmem:[%s245 + $0x438] sm:$0xff]
        %v566 = vld [vmem:[%s245 + $0x440] sm:$0xff]
        %v567 = vld [vmem:[%s245 + $0x448] sm:$0xff]
        %v568 = vld [vmem:[%s245 + $0x450] sm:$0xff]
        %v569 = vld [vmem:[%s245 + $0x458] sm:$0xff]
        %v570 = vld [vmem:[%s245 + $0x460] sm:$0xff]
        %v571 = vld [vmem:[%s245 + $0x468] sm:$0xff]
        %v572 = vld [vmem:[%s245 + $0x470] sm:$0xff]
        %v573 = vld [vmem:[%s245 + $0x478] sm:$0xff]
        %v574 = vadd.f32 %v286, %v430
        %v575 = vadd.f32 %v287, %v431
        %v576 = vadd.f32 %v288, %v432
        %v577 = vadd.f32 %v289, %v433
        %v578 = vadd.f32 %v290, %v434
        %v579 = vadd.f32 %v291, %v435
        %v580 = vadd.f32 %v292, %v436
        %v581 = vadd.f32 %v293, %v437
        %v582 = vadd.f32 %v294, %v438
        %v583 = vadd.f32 %v295, %v439
        %v584 = vadd.f32 %v296, %v440
        %v585 = vadd.f32 %v297, %v441
        %v586 = vadd.f32 %v298, %v442
        %v587 = vadd.f32 %v299, %v443
        %v588 = vadd.f32 %v300, %v444
        %v589 = vadd.f32 %v301, %v445
        %v590 = vadd.f32 %v302, %v446
        %v591 = vadd.f32 %v303, %v447
        %v592 = vadd.f32 %v304, %v448
        %v593 = vadd.f32 %v305, %v449
        %v594 = vadd.f32 %v306, %v450
        %v595 = vadd.f32 %v307, %v451
        %v596 = vadd.f32 %v308, %v452
        %v597 = vadd.f32 %v309, %v453
        %v598 = vadd.f32 %v310, %v454
        %v599 = vadd.f32 %v311, %v455
        %v600 = vadd.f32 %v312, %v456
        %v601 = vadd.f32 %v313, %v457
        %v602 = vadd.f32 %v314, %v458
        %v603 = vadd.f32 %v315, %v459
        %v604 = vadd.f32 %v316, %v460
        %v605 = vadd.f32 %v317, %v461
        %v606 = vadd.f32 %v318, %v462
        %v607 = vadd.f32 %v319, %v463
        %v608 = vadd.f32 %v320, %v464
        %v609 = vadd.f32 %v321, %v465
        %v610 = vadd.f32 %v322, %v466
        %v611 = vadd.f32 %v323, %v467
        %v612 = vadd.f32 %v324, %v468
        %v613 = vadd.f32 %v325, %v469
        %v614 = vadd.f32 %v326, %v470
        %v615 = vadd.f32 %v327, %v471
        %v616 = vadd.f32 %v328, %v472
        %v617 = vadd.f32 %v329, %v473
        %v618 = vadd.f32 %v330, %v474
        %v619 = vadd.f32 %v331, %v475
        %v620 = vadd.f32 %v332, %v476
        %v621 = vadd.f32 %v333, %v477
        %v622 = vadd.f32 %v334, %v478
        %v623 = vadd.f32 %v335, %v479
        %v624 = vadd.f32 %v336, %v480
        %v625 = vadd.f32 %v337, %v481
        %v626 = vadd.f32 %v338, %v482
        %v627 = vadd.f32 %v339, %v483
        %v628 = vadd.f32 %v340, %v484
        %v629 = vadd.f32 %v341, %v485
        %v630 = vadd.f32 %v342, %v486
        %v631 = vadd.f32 %v343, %v487
        %v632 = vadd.f32 %v344, %v488
        %v633 = vadd.f32 %v345, %v489
        %v634 = vadd.f32 %v346, %v490
        %v635 = vadd.f32 %v347, %v491
        %v636 = vadd.f32 %v348, %v492
        %v637 = vadd.f32 %v349, %v493
        %v638 = vadd.f32 %v350, %v494
        %v639 = vadd.f32 %v351, %v495
        %v640 = vadd.f32 %v352, %v496
        %v641 = vadd.f32 %v353, %v497
        %v642 = vadd.f32 %v354, %v498
        %v643 = vadd.f32 %v355, %v499
        %v644 = vadd.f32 %v356, %v500
        %v645 = vadd.f32 %v357, %v501
        %v646 = vadd.f32 %v358, %v502
        %v647 = vadd.f32 %v359, %v503
        %v648 = vadd.f32 %v360, %v504
        %v649 = vadd.f32 %v361, %v505
        %v650 = vadd.f32 %v362, %v506
        %v651 = vadd.f32 %v363, %v507
        %v652 = vadd.f32 %v364, %v508
        %v653 = vadd.f32 %v365, %v509
        %v654 = vadd.f32 %v366, %v510
        %v655 = vadd.f32 %v367, %v511
        %v656 = vadd.f32 %v368, %v512
        %v657 = vadd.f32 %v369, %v513
        %v658 = vadd.f32 %v370, %v514
        %v659 = vadd.f32 %v371, %v515
        %v660 = vadd.f32 %v372, %v516
        %v661 = vadd.f32 %v373, %v517
        %v662 = vadd.f32 %v374, %v518
        %v663 = vadd.f32 %v375, %v519
        %v664 = vadd.f32 %v376, %v520
        %v665 = vadd.f32 %v377, %v521
        %v666 = vadd.f32 %v378, %v522
        %v667 = vadd.f32 %v379, %v523
        %v668 = vadd.f32 %v380, %v524
        %v669 = vadd.f32 %v381, %v525
        %v670 = vadd.f32 %v382, %v526
        %v671 = vadd.f32 %v383, %v527
        %v672 = vadd.f32 %v384, %v528
        %v673 = vadd.f32 %v385, %v529
        %v674 = vadd.f32 %v386, %v530
        %v675 = vadd.f32 %v387, %v531
        %v676 = vadd.f32 %v388, %v532
        %v677 = vadd.f32 %v389, %v533
        %v678 = vadd.f32 %v390, %v534
        %v679 = vadd.f32 %v391, %v535
        %v680 = vadd.f32 %v392, %v536
        %v681 = vadd.f32 %v393, %v537
        %v682 = vadd.f32 %v394, %v538
        %v683 = vadd.f32 %v395, %v539
        %v684 = vadd.f32 %v396, %v540
        %v685 = vadd.f32 %v397, %v541
        %v686 = vadd.f32 %v398, %v542
        %v687 = vadd.f32 %v399, %v543
        %v688 = vadd.f32 %v400, %v544
        %v689 = vadd.f32 %v401, %v545
        %v690 = vadd.f32 %v402, %v546
        %v691 = vadd.f32 %v403, %v547
        %v692 = vadd.f32 %v404, %v548
        %v693 = vadd.f32 %v405, %v549
        %v694 = vadd.f32 %v406, %v550
        %v695 = vadd.f32 %v407, %v551
        %v696 = vadd.f32 %v408, %v552
        %v697 = vadd.f32 %v409, %v553
        %v698 = vadd.f32 %v410, %v554
        %v699 = vadd.f32 %v411, %v555
        %v700 = vadd.f32 %v412, %v556
        %v701 = vadd.f32 %v413, %v557
        %v702 = vadd.f32 %v414, %v558
        %v703 = vadd.f32 %v415, %v559
        %v704 = vadd.f32 %v416, %v560
        %v705 = vadd.f32 %v417, %v561
        %v706 = vadd.f32 %v418, %v562
        %v707 = vadd.f32 %v419, %v563
        %v708 = vadd.f32 %v420, %v564
        %v709 = vadd.f32 %v421, %v565
        %v710 = vadd.f32 %v422, %v566
        %v711 = vadd.f32 %v423, %v567
        %v712 = vadd.f32 %v424, %v568
        %v713 = vadd.f32 %v425, %v569
        %v714 = vadd.f32 %v426, %v570
        %v715 = vadd.f32 %v427, %v571
        %v716 = vadd.f32 %v428, %v572
        %v717 = vadd.f32 %v429, %v573
        %v718 = vadd.f32 %v574, %v575
        %v719 = vadd.f32 %v718, %v576
        %v720 = vadd.f32 %v719, %v577
        %v721 = vadd.f32 %v720, %v578
        %v722 = vadd.f32 %v721, %v579
        %723 = vadd.xlane.f32.xlu0 %v722
        %v724 = vpop.xlane.xlu0 %723
        %v725 = vadd.f32 %v580, %v581
        %v726 = vadd.f32 %v725, %v582
        %v727 = vadd.f32 %v726, %v583
        %v728 = vadd.f32 %v727, %v584
        %v729 = vadd.f32 %v728, %v585
        %730 = vadd.xlane.f32.xlu0 %v729
        %v731 = vpop.xlane.xlu0 %730
        %v732 = vadd.f32 %v586, %v587
        %v733 = vadd.f32 %v732, %v588
        %v734 = vadd.f32 %v733, %v589
        %v735 = vadd.f32 %v734, %v590
        %v736 = vadd.f32 %v735, %v591
        %737 = vadd.xlane.f32.xlu0 %v736
        %v738 = vpop.xlane.xlu0 %737
        %v739 = vadd.f32 %v592, %v593
        %v740 = vadd.f32 %v739, %v594
        %v741 = vadd.f32 %v740, %v595
        %v742 = vadd.f32 %v741, %v596
        %v743 = vadd.f32 %v742, %v597
        %744 = vadd.xlane.f32.xlu0 %v743
        %v745 = vpop.xlane.xlu0 %744
        %v746 = vadd.f32 %v598, %v599
        %v747 = vadd.f32 %v746, %v600
        %v748 = vadd.f32 %v747, %v601
        %v749 = vadd.f32 %v748, %v602
        %v750 = vadd.f32 %v749, %v603
        %751 = vadd.xlane.f32.xlu0 %v750
        %v752 = vpop.xlane.xlu0 %751
        %v753 = vadd.f32 %v604, %v605
        %v754 = vadd.f32 %v753, %v606
        %v755 = vadd.f32 %v754, %v607
        %v756 = vadd.f32 %v755, %v608
        %v757 = vadd.f32 %v756, %v609
        %758 = vadd.xlane.f32.xlu0 %v757
        %v759 = vpop.xlane.xlu0 %758
        %v760 = vadd.f32 %v610, %v611
        %v761 = vadd.f32 %v760, %v612
        %v762 = vadd.f32 %v761, %v613
        %v763 = vadd.f32 %v762, %v614
        %v764 = vadd.f32 %v763, %v615
        %765 = vadd.xlane.f32.xlu0 %v764
        %v766 = vpop.xlane.xlu0 %765
        %v767 = vadd.f32 %v616, %v617
        %v768 = vadd.f32 %v767, %v618
        %v769 = vadd.f32 %v768, %v619
        %v770 = vadd.f32 %v769, %v620
        %v771 = vadd.f32 %v770, %v621
        %772 = vadd.xlane.f32.xlu0 %v771
        %v773 = vpop.xlane.xlu0 %772
        %v774 = vadd.f32 %v622, %v623
        %v775 = vadd.f32 %v774, %v624
        %v776 = vadd.f32 %v775, %v625
        %v777 = vadd.f32 %v776, %v626
        %v778 = vadd.f32 %v777, %v627
        %779 = vadd.xlane.f32.xlu0 %v778
        %v780 = vpop.xlane.xlu0 %779
        %v781 = vadd.f32 %v628, %v629
        %v782 = vadd.f32 %v781, %v630
        %v783 = vadd.f32 %v782, %v631
        %v784 = vadd.f32 %v783, %v632
        %v785 = vadd.f32 %v784, %v633
        %786 = vadd.xlane.f32.xlu0 %v785
        %v787 = vpop.xlane.xlu0 %786
        %v788 = vadd.f32 %v634, %v635
        %v789 = vadd.f32 %v788, %v636
        %v790 = vadd.f32 %v789, %v637
        %v791 = vadd.f32 %v790, %v638
        %v792 = vadd.f32 %v791, %v639
        %793 = vadd.xlane.f32.xlu0 %v792
        %v794 = vpop.xlane.xlu0 %793
        %v795 = vadd.f32 %v640, %v641
        %v796 = vadd.f32 %v795, %v642
        %v797 = vadd.f32 %v796, %v643
        %v798 = vadd.f32 %v797, %v644
        %v799 = vadd.f32 %v798, %v645
        %800 = vadd.xlane.f32.xlu0 %v799
        %v801 = vpop.xlane.xlu0 %800
        %v802 = vadd.f32 %v646, %v647
        %v803 = vadd.f32 %v802, %v648
        %v804 = vadd.f32 %v803, %v649
        %v805 = vadd.f32 %v804, %v650
        %v806 = vadd.f32 %v805, %v651
        %807 = vadd.xlane.f32.xlu0 %v806
        %v808 = vpop.xlane.xlu0 %807
        %v809 = vadd.f32 %v652, %v653
        %v810 = vadd.f32 %v809, %v654
        %v811 = vadd.f32 %v810, %v655
        %v812 = vadd.f32 %v811, %v656
        %v813 = vadd.f32 %v812, %v657
        %814 = vadd.xlane.f32.xlu0 %v813
        %v815 = vpop.xlane.xlu0 %814
        %v816 = vadd.f32 %v658, %v659
        %v817 = vadd.f32 %v816, %v660
        %v818 = vadd.f32 %v817, %v661
        %v819 = vadd.f32 %v818, %v662
        %v820 = vadd.f32 %v819, %v663
        %821 = vadd.xlane.f32.xlu0 %v820
        %v822 = vpop.xlane.xlu0 %821
        %v823 = vadd.f32 %v664, %v665
        %v824 = vadd.f32 %v823, %v666
        %v825 = vadd.f32 %v824, %v667
        %v826 = vadd.f32 %v825, %v668
        %v827 = vadd.f32 %v826, %v669
        %828 = vadd.xlane.f32.xlu0 %v827
        %v829 = vpop.xlane.xlu0 %828
        %v830 = vadd.f32 %v670, %v671
        %v831 = vadd.f32 %v830, %v672
        %v832 = vadd.f32 %v831, %v673
        %v833 = vadd.f32 %v832, %v674
        %v834 = vadd.f32 %v833, %v675
        %835 = vadd.xlane.f32.xlu0 %v834
        %v836 = vpop.xlane.xlu0 %835
        %v837 = vadd.f32 %v676, %v677
        %v838 = vadd.f32 %v837, %v678
        %v839 = vadd.f32 %v838, %v679
        %v840 = vadd.f32 %v839, %v680
        %v841 = vadd.f32 %v840, %v681
        %842 = vadd.xlane.f32.xlu0 %v841
        %v843 = vpop.xlane.xlu0 %842
        %v844 = vadd.f32 %v682, %v683
        %v845 = vadd.f32 %v844, %v684
        %v846 = vadd.f32 %v845, %v685
        %v847 = vadd.f32 %v846, %v686
        %v848 = vadd.f32 %v847, %v687
        %849 = vadd.xlane.f32.xlu0 %v848
        %v850 = vpop.xlane.xlu0 %849
        %v851 = vadd.f32 %v688, %v689
        %v852 = vadd.f32 %v851, %v690
        %v853 = vadd.f32 %v852, %v691
        %v854 = vadd.f32 %v853, %v692
        %v855 = vadd.f32 %v854, %v693
        %856 = vadd.xlane.f32.xlu0 %v855
        %v857 = vpop.xlane.xlu0 %856
        %v858 = vadd.f32 %v694, %v695
        %v859 = vadd.f32 %v858, %v696
        %v860 = vadd.f32 %v859, %v697
        %v861 = vadd.f32 %v860, %v698
        %v862 = vadd.f32 %v861, %v699
        %863 = vadd.xlane.f32.xlu0 %v862
        %v864 = vpop.xlane.xlu0 %863
        %v865 = vadd.f32 %v700, %v701
        %v866 = vadd.f32 %v865, %v702
        %v867 = vadd.f32 %v866, %v703
        %v868 = vadd.f32 %v867, %v704
        %v869 = vadd.f32 %v868, %v705
        %870 = vadd.xlane.f32.xlu0 %v869
        %v871 = vpop.xlane.xlu0 %870
        %v872 = vadd.f32 %v706, %v707
        %v873 = vadd.f32 %v872, %v708
        %v874 = vadd.f32 %v873, %v709
        %v875 = vadd.f32 %v874, %v710
        %v876 = vadd.f32 %v875, %v711
        %877 = vadd.xlane.f32.xlu0 %v876
        %v878 = vpop.xlane.xlu0 %877
        %v879 = vadd.f32 %v712, %v713
        %v880 = vadd.f32 %v879, %v714
        %v881 = vadd.f32 %v880, %v715
        %v882 = vadd.f32 %v881, %v716
        %v883 = vadd.f32 %v882, %v717
        %884 = vadd.xlane.f32.xlu0 %v883
        %v885 = vpop.xlane.xlu0 %884
        %v886 = vmul.f32 %v724, 0.0013020834
        %v887 = vmul.f32 %v731, 0.0013020834
        %v888 = vmul.f32 %v738, 0.0013020834
        %v889 = vmul.f32 %v745, 0.0013020834
        %v890 = vmul.f32 %v752, 0.0013020834
        %v891 = vmul.f32 %v759, 0.0013020834
        %v892 = vmul.f32 %v766, 0.0013020834
        %v893 = vmul.f32 %v773, 0.0013020834
        %v894 = vmul.f32 %v780, 0.0013020834
        %v895 = vmul.f32 %v787, 0.0013020834
        %v896 = vmul.f32 %v794, 0.0013020834
        %v897 = vmul.f32 %v801, 0.0013020834
        %v898 = vmul.f32 %v808, 0.0013020834
        %v899 = vmul.f32 %v815, 0.0013020834
        %v900 = vmul.f32 %v822, 0.0013020834
        %v901 = vmul.f32 %v829, 0.0013020834
        %v902 = vmul.f32 %v836, 0.0013020834
        %v903 = vmul.f32 %v843, 0.0013020834
        %v904 = vmul.f32 %v850, 0.0013020834
        %v905 = vmul.f32 %v857, 0.0013020834
        %v906 = vmul.f32 %v864, 0.0013020834
        %v907 = vmul.f32 %v871, 0.0013020834
        %v908 = vmul.f32 %v878, 0.0013020834
        %v909 = vmul.f32 %v885, 0.0013020834
        %v910 = vsub.f32 %v574, %v886
        %v911 = vsub.f32 %v575, %v886
        %v912 = vsub.f32 %v576, %v886
        %v913 = vsub.f32 %v577, %v886
        %v914 = vsub.f32 %v578, %v886
        %v915 = vsub.f32 %v579, %v886
        %v916 = vsub.f32 %v580, %v887
        %v917 = vsub.f32 %v581, %v887
        %v918 = vsub.f32 %v582, %v887
        %v919 = vsub.f32 %v583, %v887
        %v920 = vsub.f32 %v584, %v887
        %v921 = vsub.f32 %v585, %v887
        %v922 = vsub.f32 %v586, %v888
        %v923 = vsub.f32 %v587, %v888
        %v924 = vsub.f32 %v588, %v888
        %v925 = vsub.f32 %v589, %v888
        %v926 = vsub.f32 %v590, %v888
        %v927 = vsub.f32 %v591, %v888
        %v928 = vsub.f32 %v592, %v889
        %v929 = vsub.f32 %v593, %v889
        %v930 = vsub.f32 %v594, %v889
        %v931 = vsub.f32 %v595, %v889
        %v932 = vsub.f32 %v596, %v889
        %v933 = vsub.f32 %v597, %v889
        %v934 = vsub.f32 %v598, %v890
        %v935 = vsub.f32 %v599, %v890
        %v936 = vsub.f32 %v600, %v890
        %v937 = vsub.f32 %v601, %v890
        %v938 = vsub.f32 %v602, %v890
        %v939 = vsub.f32 %v603, %v890
        %v940 = vsub.f32 %v604, %v891
        %v941 = vsub.f32 %v605, %v891
        %v942 = vsub.f32 %v606, %v891
        %v943 = vsub.f32 %v607, %v891
        %v944 = vsub.f32 %v608, %v891
        %v945 = vsub.f32 %v609, %v891
        %v946 = vsub.f32 %v610, %v892
        %v947 = vsub.f32 %v611, %v892
        %v948 = vsub.f32 %v612, %v892
        %v949 = vsub.f32 %v613, %v892
        %v950 = vsub.f32 %v614, %v892
        %v951 = vsub.f32 %v615, %v892
        %v952 = vsub.f32 %v616, %v893
        %v953 = vsub.f32 %v617, %v893
        %v954 = vsub.f32 %v618, %v893
        %v955 = vsub.f32 %v619, %v893
        %v956 = vsub.f32 %v620, %v893
        %v957 = vsub.f32 %v621, %v893
        %v958 = vsub.f32 %v622, %v894
        %v959 = vsub.f32 %v623, %v894
        %v960 = vsub.f32 %v624, %v894
        %v961 = vsub.f32 %v625, %v894
        %v962 = vsub.f32 %v626, %v894
        %v963 = vsub.f32 %v627, %v894
        %v964 = vsub.f32 %v628, %v895
        %v965 = vsub.f32 %v629, %v895
        %v966 = vsub.f32 %v630, %v895
        %v967 = vsub.f32 %v631, %v895
        %v968 = vsub.f32 %v632, %v895
        %v969 = vsub.f32 %v633, %v895
        %v970 = vsub.f32 %v634, %v896
        %v971 = vsub.f32 %v635, %v896
        %v972 = vsub.f32 %v636, %v896
        %v973 = vsub.f32 %v637, %v896
        %v974 = vsub.f32 %v638, %v896
        %v975 = vsub.f32 %v639, %v896
        %v976 = vsub.f32 %v640, %v897
        %v977 = vsub.f32 %v641, %v897
        %v978 = vsub.f32 %v642, %v897
        %v979 = vsub.f32 %v643, %v897
        %v980 = vsub.f32 %v644, %v897
        %v981 = vsub.f32 %v645, %v897
        %v982 = vsub.f32 %v646, %v898
        %v983 = vsub.f32 %v647, %v898
        %v984 = vsub.f32 %v648, %v898
        %v985 = vsub.f32 %v649, %v898
        %v986 = vsub.f32 %v650, %v898
        %v987 = vsub.f32 %v651, %v898
        %v988 = vsub.f32 %v652, %v899
        %v989 = vsub.f32 %v653, %v899
        %v990 = vsub.f32 %v654, %v899
        %v991 = vsub.f32 %v655, %v899
        %v992 = vsub.f32 %v656, %v899
        %v993 = vsub.f32 %v657, %v899
        %v994 = vsub.f32 %v658, %v900
        %v995 = vsub.f32 %v659, %v900
        %v996 = vsub.f32 %v660, %v900
        %v997 = vsub.f32 %v661, %v900
        %v998 = vsub.f32 %v662, %v900
        %v999 = vsub.f32 %v663, %v900
        %v1000 = vsub.f32 %v664, %v901
        %v1001 = vsub.f32 %v665, %v901
        %v1002 = vsub.f32 %v666, %v901
        %v1003 = vsub.f32 %v667, %v901
        %v1004 = vsub.f32 %v668, %v901
        %v1005 = vsub.f32 %v669, %v901
        %v1006 = vsub.f32 %v670, %v902
        %v1007 = vsub.f32 %v671, %v902
        %v1008 = vsub.f32 %v672, %v902
        %v1009 = vsub.f32 %v673, %v902
        %v1010 = vsub.f32 %v674, %v902
        %v1011 = vsub.f32 %v675, %v902
        %v1012 = vsub.f32 %v676, %v903
        %v1013 = vsub.f32 %v677, %v903
        %v1014 = vsub.f32 %v678, %v903
        %v1015 = vsub.f32 %v679, %v903
        %v1016 = vsub.f32 %v680, %v903
        %v1017 = vsub.f32 %v681, %v903
        %v1018 = vsub.f32 %v682, %v904
        %v1019 = vsub.f32 %v683, %v904
        %v1020 = vsub.f32 %v684, %v904
        %v1021 = vsub.f32 %v685, %v904
        %v1022 = vsub.f32 %v686, %v904
        %v1023 = vsub.f32 %v687, %v904
        %v1024 = vsub.f32 %v688, %v905
        %v1025 = vsub.f32 %v689, %v905
        %v1026 = vsub.f32 %v690, %v905
        %v1027 = vsub.f32 %v691, %v905
        %v1028 = vsub.f32 %v692, %v905
        %v1029 = vsub.f32 %v693, %v905
        %v1030 = vsub.f32 %v694, %v906
        %v1031 = vsub.f32 %v695, %v906
        %v1032 = vsub.f32 %v696, %v906
        %v1033 = vsub.f32 %v697, %v906
        %v1034 = vsub.f32 %v698, %v906
        %v1035 = vsub.f32 %v699, %v906
        %v1036 = vsub.f32 %v700, %v907
        %v1037 = vsub.f32 %v701, %v907
        %v1038 = vsub.f32 %v702, %v907
        %v1039 = vsub.f32 %v703, %v907
        %v1040 = vsub.f32 %v704, %v907
        %v1041 = vsub.f32 %v705, %v907
        %v1042 = vsub.f32 %v706, %v908
        %v1043 = vsub.f32 %v707, %v908
        %v1044 = vsub.f32 %v708, %v908
        %v1045 = vsub.f32 %v709, %v908
        %v1046 = vsub.f32 %v710, %v908
        %v1047 = vsub.f32 %v711, %v908
        %v1048 = vsub.f32 %v712, %v909
        %v1049 = vsub.f32 %v713, %v909
        %v1050 = vsub.f32 %v714, %v909
        %v1051 = vsub.f32 %v715, %v909
        %v1052 = vsub.f32 %v716, %v909
        %v1053 = vsub.f32 %v717, %v909
        %v1054 = vmul.f32 %v910, %v910
        %v1055 = vmul.f32 %v911, %v911
        %v1056 = vmul.f32 %v912, %v912
        %v1057 = vmul.f32 %v913, %v913
        %v1058 = vmul.f32 %v914, %v914
        %v1059 = vmul.f32 %v915, %v915
        %v1060 = vmul.f32 %v916, %v916
        %v1061 = vmul.f32 %v917, %v917
        %v1062 = vmul.f32 %v918, %v918
        %v1063 = vmul.f32 %v919, %v919
        %v1064 = vmul.f32 %v920, %v920
        %v1065 = vmul.f32 %v921, %v921
        %v1066 = vmul.f32 %v922, %v922
        %v1067 = vmul.f32 %v923, %v923
        %v1068 = vmul.f32 %v924, %v924
        %v1069 = vmul.f32 %v925, %v925
        %v1070 = vmul.f32 %v926, %v926
        %v1071 = vmul.f32 %v927, %v927
        %v1072 = vmul.f32 %v928, %v928
        %v1073 = vmul.f32 %v929, %v929
        %v1074 = vmul.f32 %v930, %v930
        %v1075 = vmul.f32 %v931, %v931
        %v1076 = vmul.f32 %v932, %v932
        %v1077 = vmul.f32 %v933, %v933
        %v1078 = vmul.f32 %v934, %v934
        %v1079 = vmul.f32 %v935, %v935
        %v1080 = vmul.f32 %v936, %v936
        %v1081 = vmul.f32 %v937, %v937
        %v1082 = vmul.f32 %v938, %v938
        %v1083 = vmul.f32 %v939, %v939
        %v1084 = vmul.f32 %v940, %v940
        %v1085 = vmul.f32 %v941, %v941
        %v1086 = vmul.f32 %v942, %v942
        %v1087 = vmul.f32 %v943, %v943
        %v1088 = vmul.f32 %v944, %v944
        %v1089 = vmul.f32 %v945, %v945
        %v1090 = vmul.f32 %v946, %v946
        %v1091 = vmul.f32 %v947, %v947
        %v1092 = vmul.f32 %v948, %v948
        %v1093 = vmul.f32 %v949, %v949
        %v1094 = vmul.f32 %v950, %v950
        %v1095 = vmul.f32 %v951, %v951
        %v1096 = vmul.f32 %v952, %v952
        %v1097 = vmul.f32 %v953, %v953
        %v1098 = vmul.f32 %v954, %v954
        %v1099 = vmul.f32 %v955, %v955
        %v1100 = vmul.f32 %v956, %v956
        %v1101 = vmul.f32 %v957, %v957
        %v1102 = vmul.f32 %v958, %v958
        %v1103 = vmul.f32 %v959, %v959
        %v1104 = vmul.f32 %v960, %v960
        %v1105 = vmul.f32 %v961, %v961
        %v1106 = vmul.f32 %v962, %v962
        %v1107 = vmul.f32 %v963, %v963
        %v1108 = vmul.f32 %v964, %v964
        %v1109 = vmul.f32 %v965, %v965
        %v1110 = vmul.f32 %v966, %v966
        %v1111 = vmul.f32 %v967, %v967
        %v1112 = vmul.f32 %v968, %v968
        %v1113 = vmul.f32 %v969, %v969
        %v1114 = vmul.f32 %v970, %v970
        %v1115 = vmul.f32 %v971, %v971
        %v1116 = vmul.f32 %v972, %v972
        %v1117 = vmul.f32 %v973, %v973
        %v1118 = vmul.f32 %v974, %v974
        %v1119 = vmul.f32 %v975, %v975
        %v1120 = vmul.f32 %v976, %v976
        %v1121 = vmul.f32 %v977, %v977
        %v1122 = vmul.f32 %v978, %v978
        %v1123 = vmul.f32 %v979, %v979
        %v1124 = vmul.f32 %v980, %v980
        %v1125 = vmul.f32 %v981, %v981
        %v1126 = vmul.f32 %v982, %v982
        %v1127 = vmul.f32 %v983, %v983
        %v1128 = vmul.f32 %v984, %v984
        %v1129 = vmul.f32 %v985, %v985
        %v1130 = vmul.f32 %v986, %v986
        %v1131 = vmul.f32 %v987, %v987
        %v1132 = vmul.f32 %v988, %v988
        %v1133 = vmul.f32 %v989, %v989
        %v1134 = vmul.f32 %v990, %v990
        %v1135 = vmul.f32 %v991, %v991
        %v1136 = vmul.f32 %v992, %v992
        %v1137 = vmul.f32 %v993, %v993
        %v1138 = vmul.f32 %v994, %v994
        %v1139 = vmul.f32 %v995, %v995
        %v1140 = vmul.f32 %v996, %v996
        %v1141 = vmul.f32 %v997, %v997
        %v1142 = vmul.f32 %v998, %v998
        %v1143 = vmul.f32 %v999, %v999
        %v1144 = vmul.f32 %v1000, %v1000
        %v1145 = vmul.f32 %v1001, %v1001
        %v1146 = vmul.f32 %v1002, %v1002
        %v1147 = vmul.f32 %v1003, %v1003
        %v1148 = vmul.f32 %v1004, %v1004
        %v1149 = vmul.f32 %v1005, %v1005
        %v1150 = vmul.f32 %v1006, %v1006
        %v1151 = vmul.f32 %v1007, %v1007
        %v1152 = vmul.f32 %v1008, %v1008
        %v1153 = vmul.f32 %v1009, %v1009
        %v1154 = vmul.f32 %v1010, %v1010
        %v1155 = vmul.f32 %v1011, %v1011
        %v1156 = vmul.f32 %v1012, %v1012
        %v1157 = vmul.f32 %v1013, %v1013
        %v1158 = vmul.f32 %v1014, %v1014
        %v1159 = vmul.f32 %v1015, %v1015
        %v1160 = vmul.f32 %v1016, %v1016
        %v1161 = vmul.f32 %v1017, %v1017
        %v1162 = vmul.f32 %v1018, %v1018
        %v1163 = vmul.f32 %v1019, %v1019
        %v1164 = vmul.f32 %v1020, %v1020
        %v1165 = vmul.f32 %v1021, %v1021
        %v1166 = vmul.f32 %v1022, %v1022
        %v1167 = vmul.f32 %v1023, %v1023
        %v1168 = vmul.f32 %v1024, %v1024
        %v1169 = vmul.f32 %v1025, %v1025
        %v1170 = vmul.f32 %v1026, %v1026
        %v1171 = vmul.f32 %v1027, %v1027
        %v1172 = vmul.f32 %v1028, %v1028
        %v1173 = vmul.f32 %v1029, %v1029
        %v1174 = vmul.f32 %v1030, %v1030
        %v1175 = vmul.f32 %v1031, %v1031
        %v1176 = vmul.f32 %v1032, %v1032
        %v1177 = vmul.f32 %v1033, %v1033
        %v1178 = vmul.f32 %v1034, %v1034
        %v1179 = vmul.f32 %v1035, %v1035
        %v1180 = vmul.f32 %v1036, %v1036
        %v1181 = vmul.f32 %v1037, %v1037
        %v1182 = vmul.f32 %v1038, %v1038
        %v1183 = vmul.f32 %v1039, %v1039
        %v1184 = vmul.f32 %v1040, %v1040
        %v1185 = vmul.f32 %v1041, %v1041
        %v1186 = vmul.f32 %v1042, %v1042
        %v1187 = vmul.f32 %v1043, %v1043
        %v1188 = vmul.f32 %v1044, %v1044
        %v1189 = vmul.f32 %v1045, %v1045
        %v1190 = vmul.f32 %v1046, %v1046
        %v1191 = vmul.f32 %v1047, %v1047
        %v1192 = vmul.f32 %v1048, %v1048
        %v1193 = vmul.f32 %v1049, %v1049
        %v1194 = vmul.f32 %v1050, %v1050
        %v1195 = vmul.f32 %v1051, %v1051
        %v1196 = vmul.f32 %v1052, %v1052
        %v1197 = vmul.f32 %v1053, %v1053
        %v1198 = vadd.f32 %v1054, %v1055
        %v1199 = vadd.f32 %v1198, %v1056
        %v1200 = vadd.f32 %v1199, %v1057
        %v1201 = vadd.f32 %v1200, %v1058
        %v1202 = vadd.f32 %v1201, %v1059
        %1203 = vadd.xlane.f32.xlu0 %v1202
        %v1204 = vpop.xlane.xlu0 %1203
        %v1205 = vadd.f32 %v1060, %v1061
        %v1206 = vadd.f32 %v1205, %v1062
        %v1207 = vadd.f32 %v1206, %v1063
        %v1208 = vadd.f32 %v1207, %v1064
        %v1209 = vadd.f32 %v1208, %v1065
        %1210 = vadd.xlane.f32.xlu0 %v1209
        %v1211 = vpop.xlane.xlu0 %1210
        %v1212 = vadd.f32 %v1066, %v1067
        %v1213 = vadd.f32 %v1212, %v1068
        %v1214 = vadd.f32 %v1213, %v1069
        %v1215 = vadd.f32 %v1214, %v1070
        %v1216 = vadd.f32 %v1215, %v1071
        %1217 = vadd.xlane.f32.xlu0 %v1216
        %v1218 = vpop.xlane.xlu0 %1217
        %v1219 = vadd.f32 %v1072, %v1073
        %v1220 = vadd.f32 %v1219, %v1074
        %v1221 = vadd.f32 %v1220, %v1075
        %v1222 = vadd.f32 %v1221, %v1076
        %v1223 = vadd.f32 %v1222, %v1077
        %1224 = vadd.xlane.f32.xlu0 %v1223
        %v1225 = vpop.xlane.xlu0 %1224
        %v1226 = vadd.f32 %v1078, %v1079
        %v1227 = vadd.f32 %v1226, %v1080
        %v1228 = vadd.f32 %v1227, %v1081
        %v1229 = vadd.f32 %v1228, %v1082
        %v1230 = vadd.f32 %v1229, %v1083
        %1231 = vadd.xlane.f32.xlu0 %v1230
        %v1232 = vpop.xlane.xlu0 %1231
        %v1233 = vadd.f32 %v1084, %v1085
        %v1234 = vadd.f32 %v1233, %v1086
        %v1235 = vadd.f32 %v1234, %v1087
        %v1236 = vadd.f32 %v1235, %v1088
        %v1237 = vadd.f32 %v1236, %v1089
        %1238 = vadd.xlane.f32.xlu0 %v1237
        %v1239 = vpop.xlane.xlu0 %1238
        %v1240 = vadd.f32 %v1090, %v1091
        %v1241 = vadd.f32 %v1240, %v1092
        %v1242 = vadd.f32 %v1241, %v1093
        %v1243 = vadd.f32 %v1242, %v1094
        %v1244 = vadd.f32 %v1243, %v1095
        %1245 = vadd.xlane.f32.xlu0 %v1244
        %v1246 = vpop.xlane.xlu0 %1245
        %v1247 = vadd.f32 %v1096, %v1097
        %v1248 = vadd.f32 %v1247, %v1098
        %v1249 = vadd.f32 %v1248, %v1099
        %v1250 = vadd.f32 %v1249, %v1100
        %v1251 = vadd.f32 %v1250, %v1101
        %1252 = vadd.xlane.f32.xlu0 %v1251
        %v1253 = vpop.xlane.xlu0 %1252
        %v1254 = vadd.f32 %v1102, %v1103
        %v1255 = vadd.f32 %v1254, %v1104
        %v1256 = vadd.f32 %v1255, %v1105
        %v1257 = vadd.f32 %v1256, %v1106
        %v1258 = vadd.f32 %v1257, %v1107
        %1259 = vadd.xlane.f32.xlu0 %v1258
        %v1260 = vpop.xlane.xlu0 %1259
        %v1261 = vadd.f32 %v1108, %v1109
        %v1262 = vadd.f32 %v1261, %v1110
        %v1263 = vadd.f32 %v1262, %v1111
        %v1264 = vadd.f32 %v1263, %v1112
        %v1265 = vadd.f32 %v1264, %v1113
        %1266 = vadd.xlane.f32.xlu0 %v1265
        %v1267 = vpop.xlane.xlu0 %1266
        %v1268 = vadd.f32 %v1114, %v1115
        %v1269 = vadd.f32 %v1268, %v1116
        %v1270 = vadd.f32 %v1269, %v1117
        %v1271 = vadd.f32 %v1270, %v1118
        %v1272 = vadd.f32 %v1271, %v1119
        %1273 = vadd.xlane.f32.xlu0 %v1272
        %v1274 = vpop.xlane.xlu0 %1273
        %v1275 = vadd.f32 %v1120, %v1121
        %v1276 = vadd.f32 %v1275, %v1122
        %v1277 = vadd.f32 %v1276, %v1123
        %v1278 = vadd.f32 %v1277, %v1124
        %v1279 = vadd.f32 %v1278, %v1125
        %1280 = vadd.xlane.f32.xlu0 %v1279
        %v1281 = vpop.xlane.xlu0 %1280
        %v1282 = vadd.f32 %v1126, %v1127
        %v1283 = vadd.f32 %v1282, %v1128
        %v1284 = vadd.f32 %v1283, %v1129
        %v1285 = vadd.f32 %v1284, %v1130
        %v1286 = vadd.f32 %v1285, %v1131
        %1287 = vadd.xlane.f32.xlu0 %v1286
        %v1288 = vpop.xlane.xlu0 %1287
        %v1289 = vadd.f32 %v1132, %v1133
        %v1290 = vadd.f32 %v1289, %v1134
        %v1291 = vadd.f32 %v1290, %v1135
        %v1292 = vadd.f32 %v1291, %v1136
        %v1293 = vadd.f32 %v1292, %v1137
        %1294 = vadd.xlane.f32.xlu0 %v1293
        %v1295 = vpop.xlane.xlu0 %1294
        %v1296 = vadd.f32 %v1138, %v1139
        %v1297 = vadd.f32 %v1296, %v1140
        %v1298 = vadd.f32 %v1297, %v1141
        %v1299 = vadd.f32 %v1298, %v1142
        %v1300 = vadd.f32 %v1299, %v1143
        %1301 = vadd.xlane.f32.xlu0 %v1300
        %v1302 = vpop.xlane.xlu0 %1301
        %v1303 = vadd.f32 %v1144, %v1145
        %v1304 = vadd.f32 %v1303, %v1146
        %v1305 = vadd.f32 %v1304, %v1147
        %v1306 = vadd.f32 %v1305, %v1148
        %v1307 = vadd.f32 %v1306, %v1149
        %1308 = vadd.xlane.f32.xlu0 %v1307
        %v1309 = vpop.xlane.xlu0 %1308
        %v1310 = vadd.f32 %v1150, %v1151
        %v1311 = vadd.f32 %v1310, %v1152
        %v1312 = vadd.f32 %v1311, %v1153
        %v1313 = vadd.f32 %v1312, %v1154
        %v1314 = vadd.f32 %v1313, %v1155
        %1315 = vadd.xlane.f32.xlu0 %v1314
        %v1316 = vpop.xlane.xlu0 %1315
        %v1317 = vadd.f32 %v1156, %v1157
        %v1318 = vadd.f32 %v1317, %v1158
        %v1319 = vadd.f32 %v1318, %v1159
        %v1320 = vadd.f32 %v1319, %v1160
        %v1321 = vadd.f32 %v1320, %v1161
        %1322 = vadd.xlane.f32.xlu0 %v1321
        %v1323 = vpop.xlane.xlu0 %1322
        %v1324 = vadd.f32 %v1162, %v1163
        %v1325 = vadd.f32 %v1324, %v1164
        %v1326 = vadd.f32 %v1325, %v1165
        %v1327 = vadd.f32 %v1326, %v1166
        %v1328 = vadd.f32 %v1327, %v1167
        %1329 = vadd.xlane.f32.xlu0 %v1328
        %v1330 = vpop.xlane.xlu0 %1329
        %v1331 = vadd.f32 %v1168, %v1169
        %v1332 = vadd.f32 %v1331, %v1170
        %v1333 = vadd.f32 %v1332, %v1171
        %v1334 = vadd.f32 %v1333, %v1172
        %v1335 = vadd.f32 %v1334, %v1173
        %1336 = vadd.xlane.f32.xlu0 %v1335
        %v1337 = vpop.xlane.xlu0 %1336
        %v1338 = vadd.f32 %v1174, %v1175
        %v1339 = vadd.f32 %v1338, %v1176
        %v1340 = vadd.f32 %v1339, %v1177
        %v1341 = vadd.f32 %v1340, %v1178
        %v1342 = vadd.f32 %v1341, %v1179
        %1343 = vadd.xlane.f32.xlu0 %v1342
        %v1344 = vpop.xlane.xlu0 %1343
        %v1345 = vadd.f32 %v1180, %v1181
        %v1346 = vadd.f32 %v1345, %v1182
        %v1347 = vadd.f32 %v1346, %v1183
        %v1348 = vadd.f32 %v1347, %v1184
        %v1349 = vadd.f32 %v1348, %v1185
        %1350 = vadd.xlane.f32.xlu0 %v1349
        %v1351 = vpop.xlane.xlu0 %1350
        %v1352 = vadd.f32 %v1186, %v1187
        %v1353 = vadd.f32 %v1352, %v1188
        %v1354 = vadd.f32 %v1353, %v1189
        %v1355 = vadd.f32 %v1354, %v1190
        %v1356 = vadd.f32 %v1355, %v1191
        %1357 = vadd.xlane.f32.xlu0 %v1356
        %v1358 = vpop.xlane.xlu0 %1357
        %v1359 = vadd.f32 %v1192, %v1193
        %v1360 = vadd.f32 %v1359, %v1194
        %v1361 = vadd.f32 %v1360, %v1195
        %v1362 = vadd.f32 %v1361, %v1196
        %v1363 = vadd.f32 %v1362, %v1197
        %1364 = vadd.xlane.f32.xlu0 %v1363
        %v1365 = vpop.xlane.xlu0 %1364
        %v1366 = vmul.f32 %v1204, 0.0013020834
        %v1367 = vmul.f32 %v1211, 0.0013020834
        %v1368 = vmul.f32 %v1218, 0.0013020834
        %v1369 = vmul.f32 %v1225, 0.0013020834
        %v1370 = vmul.f32 %v1232, 0.0013020834
        %v1371 = vmul.f32 %v1239, 0.0013020834
        %v1372 = vmul.f32 %v1246, 0.0013020834
        %v1373 = vmul.f32 %v1253, 0.0013020834
        %v1374 = vmul.f32 %v1260, 0.0013020834
        %v1375 = vmul.f32 %v1267, 0.0013020834
        %v1376 = vmul.f32 %v1274, 0.0013020834
        %v1377 = vmul.f32 %v1281, 0.0013020834
        %v1378 = vmul.f32 %v1288, 0.0013020834
        %v1379 = vmul.f32 %v1295, 0.0013020834
        %v1380 = vmul.f32 %v1302, 0.0013020834
        %v1381 = vmul.f32 %v1309, 0.0013020834
        %v1382 = vmul.f32 %v1316, 0.0013020834
        %v1383 = vmul.f32 %v1323, 0.0013020834
        %v1384 = vmul.f32 %v1330, 0.0013020834
        %v1385 = vmul.f32 %v1337, 0.0013020834
        %v1386 = vmul.f32 %v1344, 0.0013020834
        %v1387 = vmul.f32 %v1351, 0.0013020834
        %v1388 = vmul.f32 %v1358, 0.0013020834
        %v1389 = vmul.f32 %v1365, 0.0013020834
        %v1390 = vadd.f32 %v1366, 1e-05
        %v1391 = vadd.f32 %v1367, 1e-05
        %v1392 = vadd.f32 %v1368, 1e-05
        %v1393 = vadd.f32 %v1369, 1e-05
        %v1394 = vadd.f32 %v1370, 1e-05
        %v1395 = vadd.f32 %v1371, 1e-05
        %v1396 = vadd.f32 %v1372, 1e-05
        %v1397 = vadd.f32 %v1373, 1e-05
        %v1398 = vadd.f32 %v1374, 1e-05
        %v1399 = vadd.f32 %v1375, 1e-05
        %v1400 = vadd.f32 %v1376, 1e-05
        %v1401 = vadd.f32 %v1377, 1e-05
        %v1402 = vadd.f32 %v1378, 1e-05
        %v1403 = vadd.f32 %v1379, 1e-05
        %v1404 = vadd.f32 %v1380, 1e-05
        %v1405 = vadd.f32 %v1381, 1e-05
        %v1406 = vadd.f32 %v1382, 1e-05
        %v1407 = vadd.f32 %v1383, 1e-05
        %v1408 = vadd.f32 %v1384, 1e-05
        %v1409 = vadd.f32 %v1385, 1e-05
        %v1410 = vadd.f32 %v1386, 1e-05
        %v1411 = vadd.f32 %v1387, 1e-05
        %v1412 = vadd.f32 %v1388, 1e-05
        %v1413 = vadd.f32 %v1389, 1e-05
        %v1414 = vrsqrt.pop %v1390
        %v1415 = vrsqrt.pop %v1391
        %v1416 = vrsqrt.pop %v1392
        %v1417 = vrsqrt.pop %v1393
        %v1418 = vrsqrt.pop %v1394
        %v1419 = vrsqrt.pop %v1395
        %v1420 = vrsqrt.pop %v1396
        %v1421 = vrsqrt.pop %v1397
        %v1422 = vrsqrt.pop %v1398
        %v1423 = vrsqrt.pop %v1399
        %v1424 = vrsqrt.pop %v1400
        %v1425 = vrsqrt.pop %v1401
        %v1426 = vrsqrt.pop %v1402
        %v1427 = vrsqrt.pop %v1403
        %v1428 = vrsqrt.pop %v1404
        %v1429 = vrsqrt.pop %v1405
        %v1430 = vrsqrt.pop %v1406
        %v1431 = vrsqrt.pop %v1407
        %v1432 = vrsqrt.pop %v1408
        %v1433 = vrsqrt.pop %v1409
        %v1434 = vrsqrt.pop %v1410
        %v1435 = vrsqrt.pop %v1411
        %v1436 = vrsqrt.pop %v1412
        %v1437 = vrsqrt.pop %v1413
        %v1438 = vld [vmem:[#allocation7] sm:$0x3f]
        %v1439 = vld [vmem:[#allocation8] sm:$0x3f]
        %v1440 = vmul.f32 %v910, %v1414
        %v1441 = vmul.f32 %v911, %v1414
        %v1442 = vmul.f32 %v912, %v1414
        %v1443 = vmul.f32 %v913, %v1414
        %v1444 = vmul.f32 %v914, %v1414
        %v1445 = vmul.f32 %v915, %v1414
        %v1446 = vmul.f32 %v916, %v1415
        %v1447 = vmul.f32 %v917, %v1415
        %v1448 = vmul.f32 %v918, %v1415
        %v1449 = vmul.f32 %v919, %v1415
        %v1450 = vmul.f32 %v920, %v1415
        %v1451 = vmul.f32 %v921, %v1415
        %v1452 = vmul.f32 %v922, %v1416
        %v1453 = vmul.f32 %v923, %v1416
        %v1454 = vmul.f32 %v924, %v1416
        %v1455 = vmul.f32 %v925, %v1416
        %v1456 = vmul.f32 %v926, %v1416
        %v1457 = vmul.f32 %v927, %v1416
        %v1458 = vmul.f32 %v928, %v1417
        %v1459 = vmul.f32 %v929, %v1417
        %v1460 = vmul.f32 %v930, %v1417
        %v1461 = vmul.f32 %v931, %v1417
        %v1462 = vmul.f32 %v932, %v1417
        %v1463 = vmul.f32 %v933, %v1417
        %v1464 = vmul.f32 %v934, %v1418
        %v1465 = vmul.f32 %v935, %v1418
        %v1466 = vmul.f32 %v936, %v1418
        %v1467 = vmul.f32 %v937, %v1418
        %v1468 = vmul.f32 %v938, %v1418
        %v1469 = vmul.f32 %v939, %v1418
        %v1470 = vmul.f32 %v940, %v1419
        %v1471 = vmul.f32 %v941, %v1419
        %v1472 = vmul.f32 %v942, %v1419
        %v1473 = vmul.f32 %v943, %v1419
        %v1474 = vmul.f32 %v944, %v1419
        %v1475 = vmul.f32 %v945, %v1419
        %v1476 = vmul.f32 %v946, %v1420
        %v1477 = vmul.f32 %v947, %v1420
        %v1478 = vmul.f32 %v948, %v1420
        %v1479 = vmul.f32 %v949, %v1420
        %v1480 = vmul.f32 %v950, %v1420
        %v1481 = vmul.f32 %v951, %v1420
        %v1482 = vmul.f32 %v952, %v1421
        %v1483 = vmul.f32 %v953, %v1421
        %v1484 = vmul.f32 %v954, %v1421
        %v1485 = vmul.f32 %v955, %v1421
        %v1486 = vmul.f32 %v956, %v1421
        %v1487 = vmul.f32 %v957, %v1421
        %v1488 = vmul.f32 %v958, %v1422
        %v1489 = vmul.f32 %v959, %v1422
        %v1490 = vmul.f32 %v960, %v1422
        %v1491 = vmul.f32 %v961, %v1422
        %v1492 = vmul.f32 %v962, %v1422
        %v1493 = vmul.f32 %v963, %v1422
        %v1494 = vmul.f32 %v964, %v1423
        %v1495 = vmul.f32 %v965, %v1423
        %v1496 = vmul.f32 %v966, %v1423
        %v1497 = vmul.f32 %v967, %v1423
        %v1498 = vmul.f32 %v968, %v1423
        %v1499 = vmul.f32 %v969, %v1423
        %v1500 = vmul.f32 %v970, %v1424
        %v1501 = vmul.f32 %v971, %v1424
        %v1502 = vmul.f32 %v972, %v1424
        %v1503 = vmul.f32 %v973, %v1424
        %v1504 = vmul.f32 %v974, %v1424
        %v1505 = vmul.f32 %v975, %v1424
        %v1506 = vmul.f32 %v976, %v1425
        %v1507 = vmul.f32 %v977, %v1425
        %v1508 = vmul.f32 %v978, %v1425
        %v1509 = vmul.f32 %v979, %v1425
        %v1510 = vmul.f32 %v980, %v1425
        %v1511 = vmul.f32 %v981, %v1425
        %v1512 = vmul.f32 %v982, %v1426
        %v1513 = vmul.f32 %v983, %v1426
        %v1514 = vmul.f32 %v984, %v1426
        %v1515 = vmul.f32 %v985, %v1426
        %v1516 = vmul.f32 %v986, %v1426
        %v1517 = vmul.f32 %v987, %v1426
        %v1518 = vmul.f32 %v988, %v1427
        %v1519 = vmul.f32 %v989, %v1427
        %v1520 = vmul.f32 %v990, %v1427
        %v1521 = vmul.f32 %v991, %v1427
        %v1522 = vmul.f32 %v992, %v1427
        %v1523 = vmul.f32 %v993, %v1427
        %v1524 = vmul.f32 %v994, %v1428
        %v1525 = vmul.f32 %v995, %v1428
        %v1526 = vmul.f32 %v996, %v1428
        %v1527 = vmul.f32 %v997, %v1428
        %v1528 = vmul.f32 %v998, %v1428
        %v1529 = vmul.f32 %v999, %v1428
        %v1530 = vmul.f32 %v1000, %v1429
        %v1531 = vmul.f32 %v1001, %v1429
        %v1532 = vmul.f32 %v1002, %v1429
        %v1533 = vmul.f32 %v1003, %v1429
        %v1534 = vmul.f32 %v1004, %v1429
        %v1535 = vmul.f32 %v1005, %v1429
        %v1536 = vmul.f32 %v1006, %v1430
        %v1537 = vmul.f32 %v1007, %v1430
        %v1538 = vmul.f32 %v1008, %v1430
        %v1539 = vmul.f32 %v1009, %v1430
        %v1540 = vmul.f32 %v1010, %v1430
        %v1541 = vmul.f32 %v1011, %v1430
        %v1542 = vmul.f32 %v1012, %v1431
        %v1543 = vmul.f32 %v1013, %v1431
        %v1544 = vmul.f32 %v1014, %v1431
        %v1545 = vmul.f32 %v1015, %v1431
        %v1546 = vmul.f32 %v1016, %v1431
        %v1547 = vmul.f32 %v1017, %v1431
        %v1548 = vmul.f32 %v1018, %v1432
        %v1549 = vmul.f32 %v1019, %v1432
        %v1550 = vmul.f32 %v1020, %v1432
        %v1551 = vmul.f32 %v1021, %v1432
        %v1552 = vmul.f32 %v1022, %v1432
        %v1553 = vmul.f32 %v1023, %v1432
        %v1554 = vmul.f32 %v1024, %v1433
        %v1555 = vmul.f32 %v1025, %v1433
        %v1556 = vmul.f32 %v1026, %v1433
        %v1557 = vmul.f32 %v1027, %v1433
        %v1558 = vmul.f32 %v1028, %v1433
        %v1559 = vmul.f32 %v1029, %v1433
        %v1560 = vmul.f32 %v1030, %v1434
        %v1561 = vmul.f32 %v1031, %v1434
        %v1562 = vmul.f32 %v1032, %v1434
        %v1563 = vmul.f32 %v1033, %v1434
        %v1564 = vmul.f32 %v1034, %v1434
        %v1565 = vmul.f32 %v1035, %v1434
        %v1566 = vmul.f32 %v1036, %v1435
        %v1567 = vmul.f32 %v1037, %v1435
        %v1568 = vmul.f32 %v1038, %v1435
        %v1569 = vmul.f32 %v1039, %v1435
        %v1570 = vmul.f32 %v1040, %v1435
        %v1571 = vmul.f32 %v1041, %v1435
        %v1572 = vmul.f32 %v1042, %v1436
        %v1573 = vmul.f32 %v1043, %v1436
        %v1574 = vmul.f32 %v1044, %v1436
        %v1575 = vmul.f32 %v1045, %v1436
        %v1576 = vmul.f32 %v1046, %v1436
        %v1577 = vmul.f32 %v1047, %v1436
        %v1578 = vmul.f32 %v1048, %v1437
        %v1579 = vmul.f32 %v1049, %v1437
        %v1580 = vmul.f32 %v1050, %v1437
        %v1581 = vmul.f32 %v1051, %v1437
        %v1582 = vmul.f32 %v1052, %v1437
        %v1583 = vmul.f32 %v1053, %v1437
        %v1585 = vlaneseq
        %v1586 = vshrl.u32 %v1585, 7
        %v1587 = vsub.s32 0, %v1586
        %v1588 = vrot.slane %v1438, %v1587
        %v1589 = vlaneseq
        %v1590 = vshrl.u32 %v1589, 7
        %v1591 = vsub.s32 1, %v1590
        %v1592 = vrot.slane %v1438, %v1591
        %v1593 = vlaneseq
        %v1594 = vshrl.u32 %v1593, 7
        %v1595 = vsub.s32 2, %v1594
        %v1596 = vrot.slane %v1438, %v1595
        %v1597 = vlaneseq
        %v1598 = vshrl.u32 %v1597, 7
        %v1599 = vsub.s32 3, %v1598
        %v1600 = vrot.slane %v1438, %v1599
        %v1601 = vlaneseq
        %v1602 = vshrl.u32 %v1601, 7
        %v1603 = vsub.s32 4, %v1602
        %v1604 = vrot.slane %v1438, %v1603
        %v1605 = vlaneseq
        %v1606 = vshrl.u32 %v1605, 7
        %v1607 = vsub.s32 5, %v1606
        %v1608 = vrot.slane %v1438, %v1607
        %v1615 = vmul.f32 %v1440, %v1588
        %v1616 = vmul.f32 %v1441, %v1592
        %v1617 = vmul.f32 %v1442, %v1596
        %v1618 = vmul.f32 %v1443, %v1600
        %v1619 = vmul.f32 %v1444, %v1604
        %v1620 = vmul.f32 %v1445, %v1608
        %v1621 = vmul.f32 %v1446, %v1588
        %v1622 = vmul.f32 %v1447, %v1592
        %v1623 = vmul.f32 %v1448, %v1596
        %v1624 = vmul.f32 %v1449, %v1600
        %v1625 = vmul.f32 %v1450, %v1604
        %v1626 = vmul.f32 %v1451, %v1608
        %v1627 = vmul.f32 %v1452, %v1588
        %v1628 = vmul.f32 %v1453, %v1592
        %v1629 = vmul.f32 %v1454, %v1596
        %v1630 = vmul.f32 %v1455, %v1600
        %v1631 = vmul.f32 %v1456, %v1604
        %v1632 = vmul.f32 %v1457, %v1608
        %v1633 = vmul.f32 %v1458, %v1588
        %v1634 = vmul.f32 %v1459, %v1592
        %v1635 = vmul.f32 %v1460, %v1596
        %v1636 = vmul.f32 %v1461, %v1600
        %v1637 = vmul.f32 %v1462, %v1604
        %v1638 = vmul.f32 %v1463, %v1608
        %v1639 = vmul.f32 %v1464, %v1588
        %v1640 = vmul.f32 %v1465, %v1592
        %v1641 = vmul.f32 %v1466, %v1596
        %v1642 = vmul.f32 %v1467, %v1600
        %v1643 = vmul.f32 %v1468, %v1604
        %v1644 = vmul.f32 %v1469, %v1608
        %v1645 = vmul.f32 %v1470, %v1588
        %v1646 = vmul.f32 %v1471, %v1592
        %v1647 = vmul.f32 %v1472, %v1596
        %v1648 = vmul.f32 %v1473, %v1600
        %v1649 = vmul.f32 %v1474, %v1604
        %v1650 = vmul.f32 %v1475, %v1608
        %v1651 = vmul.f32 %v1476, %v1588
        %v1652 = vmul.f32 %v1477, %v1592
        %v1653 = vmul.f32 %v1478, %v1596
        %v1654 = vmul.f32 %v1479, %v1600
        %v1655 = vmul.f32 %v1480, %v1604
        %v1656 = vmul.f32 %v1481, %v1608
        %v1657 = vmul.f32 %v1482, %v1588
        %v1658 = vmul.f32 %v1483, %v1592
        %v1659 = vmul.f32 %v1484, %v1596
        %v1660 = vmul.f32 %v1485, %v1600
        %v1661 = vmul.f32 %v1486, %v1604
        %v1662 = vmul.f32 %v1487, %v1608
        %v1663 = vmul.f32 %v1488, %v1588
        %v1664 = vmul.f32 %v1489, %v1592
        %v1665 = vmul.f32 %v1490, %v1596
        %v1666 = vmul.f32 %v1491, %v1600
        %v1667 = vmul.f32 %v1492, %v1604
        %v1668 = vmul.f32 %v1493, %v1608
        %v1669 = vmul.f32 %v1494, %v1588
        %v1670 = vmul.f32 %v1495, %v1592
        %v1671 = vmul.f32 %v1496, %v1596
        %v1672 = vmul.f32 %v1497, %v1600
        %v1673 = vmul.f32 %v1498, %v1604
        %v1674 = vmul.f32 %v1499, %v1608
        %v1675 = vmul.f32 %v1500, %v1588
        %v1676 = vmul.f32 %v1501, %v1592
        %v1677 = vmul.f32 %v1502, %v1596
        %v1678 = vmul.f32 %v1503, %v1600
        %v1679 = vmul.f32 %v1504, %v1604
        %v1680 = vmul.f32 %v1505, %v1608
        %v1681 = vmul.f32 %v1506, %v1588
        %v1682 = vmul.f32 %v1507, %v1592
        %v1683 = vmul.f32 %v1508, %v1596
        %v1684 = vmul.f32 %v1509, %v1600
        %v1685 = vmul.f32 %v1510, %v1604
        %v1686 = vmul.f32 %v1511, %v1608
        %v1687 = vmul.f32 %v1512, %v1588
        %v1688 = vmul.f32 %v1513, %v1592
        %v1689 = vmul.f32 %v1514, %v1596
        %v1690 = vmul.f32 %v1515, %v1600
        %v1691 = vmul.f32 %v1516, %v1604
        %v1692 = vmul.f32 %v1517, %v1608
        %v1693 = vmul.f32 %v1518, %v1588
        %v1694 = vmul.f32 %v1519, %v1592
        %v1695 = vmul.f32 %v1520, %v1596
        %v1696 = vmul.f32 %v1521, %v1600
        %v1697 = vmul.f32 %v1522, %v1604
        %v1698 = vmul.f32 %v1523, %v1608
        %v1699 = vmul.f32 %v1524, %v1588
        %v1700 = vmul.f32 %v1525, %v1592
        %v1701 = vmul.f32 %v1526, %v1596
        %v1702 = vmul.f32 %v1527, %v1600
        %v1703 = vmul.f32 %v1528, %v1604
        %v1704 = vmul.f32 %v1529, %v1608
        %v1705 = vmul.f32 %v1530, %v1588
        %v1706 = vmul.f32 %v1531, %v1592
        %v1707 = vmul.f32 %v1532, %v1596
        %v1708 = vmul.f32 %v1533, %v1600
        %v1709 = vmul.f32 %v1534, %v1604
        %v1710 = vmul.f32 %v1535, %v1608
        %v1711 = vmul.f32 %v1536, %v1588
        %v1712 = vmul.f32 %v1537, %v1592
        %v1713 = vmul.f32 %v1538, %v1596
        %v1714 = vmul.f32 %v1539, %v1600
        %v1715 = vmul.f32 %v1540, %v1604
        %v1716 = vmul.f32 %v1541, %v1608
        %v1717 = vmul.f32 %v1542, %v1588
        %v1718 = vmul.f32 %v1543, %v1592
        %v1719 = vmul.f32 %v1544, %v1596
        %v1720 = vmul.f32 %v1545, %v1600
        %v1721 = vmul.f32 %v1546, %v1604
        %v1722 = vmul.f32 %v1547, %v1608
        %v1723 = vmul.f32 %v1548, %v1588
        %v1724 = vmul.f32 %v1549, %v1592
        %v1725 = vmul.f32 %v1550, %v1596
        %v1726 = vmul.f32 %v1551, %v1600
        %v1727 = vmul.f32 %v1552, %v1604
        %v1728 = vmul.f32 %v1553, %v1608
        %v1729 = vmul.f32 %v1554, %v1588
        %v1730 = vmul.f32 %v1555, %v1592
        %v1731 = vmul.f32 %v1556, %v1596
        %v1732 = vmul.f32 %v1557, %v1600
        %v1733 = vmul.f32 %v1558, %v1604
        %v1734 = vmul.f32 %v1559, %v1608
        %v1735 = vmul.f32 %v1560, %v1588
        %v1736 = vmul.f32 %v1561, %v1592
        %v1737 = vmul.f32 %v1562, %v1596
        %v1738 = vmul.f32 %v1563, %v1600
        %v1739 = vmul.f32 %v1564, %v1604
        %v1740 = vmul.f32 %v1565, %v1608
        %v1741 = vmul.f32 %v1566, %v1588
        %v1742 = vmul.f32 %v1567, %v1592
        %v1743 = vmul.f32 %v1568, %v1596
        %v1744 = vmul.f32 %v1569, %v1600
        %v1745 = vmul.f32 %v1570, %v1604
        %v1746 = vmul.f32 %v1571, %v1608
        %v1747 = vmul.f32 %v1572, %v1588
        %v1748 = vmul.f32 %v1573, %v1592
        %v1749 = vmul.f32 %v1574, %v1596
        %v1750 = vmul.f32 %v1575, %v1600
        %v1751 = vmul.f32 %v1576, %v1604
        %v1752 = vmul.f32 %v1577, %v1608
        %v1753 = vmul.f32 %v1578, %v1588
        %v1754 = vmul.f32 %v1579, %v1592
        %v1755 = vmul.f32 %v1580, %v1596
        %v1756 = vmul.f32 %v1581, %v1600
        %v1757 = vmul.f32 %v1582, %v1604
        %v1758 = vmul.f32 %v1583, %v1608
        %v1760 = vlaneseq
        %v1761 = vshrl.u32 %v1760, 7
        %v1762 = vsub.s32 0, %v1761
        %v1763 = vrot.slane %v1439, %v1762
        %v1764 = vlaneseq
        %v1765 = vshrl.u32 %v1764, 7
        %v1766 = vsub.s32 1, %v1765
        %v1767 = vrot.slane %v1439, %v1766
        %v1768 = vlaneseq
        %v1769 = vshrl.u32 %v1768, 7
        %v1770 = vsub.s32 2, %v1769
        %v1771 = vrot.slane %v1439, %v1770
        %v1772 = vlaneseq
        %v1773 = vshrl.u32 %v1772, 7
        %v1774 = vsub.s32 3, %v1773
        %v1775 = vrot.slane %v1439, %v1774
        %v1776 = vlaneseq
        %v1777 = vshrl.u32 %v1776, 7
        %v1778 = vsub.s32 4, %v1777
        %v1779 = vrot.slane %v1439, %v1778
        %v1780 = vlaneseq
        %v1781 = vshrl.u32 %v1780, 7
        %v1782 = vsub.s32 5, %v1781
        %v1783 = vrot.slane %v1439, %v1782
        %v1790 = vadd.f32 %v1615, %v1763
        %v1791 = vadd.f32 %v1616, %v1767
        %v1792 = vadd.f32 %v1617, %v1771
        %v1793 = vadd.f32 %v1618, %v1775
        %v1794 = vadd.f32 %v1619, %v1779
        %v1795 = vadd.f32 %v1620, %v1783
        %v1796 = vadd.f32 %v1621, %v1763
        %v1797 = vadd.f32 %v1622, %v1767
        %v1798 = vadd.f32 %v1623, %v1771
        %v1799 = vadd.f32 %v1624, %v1775
        %v1800 = vadd.f32 %v1625, %v1779
        %v1801 = vadd.f32 %v1626, %v1783
        %v1802 = vadd.f32 %v1627, %v1763
        %v1803 = vadd.f32 %v1628, %v1767
        %v1804 = vadd.f32 %v1629, %v1771
        %v1805 = vadd.f32 %v1630, %v1775
        %v1806 = vadd.f32 %v1631, %v1779
        %v1807 = vadd.f32 %v1632, %v1783
        %v1808 = vadd.f32 %v1633, %v1763
        %v1809 = vadd.f32 %v1634, %v1767
        %v1810 = vadd.f32 %v1635, %v1771
        %v1811 = vadd.f32 %v1636, %v1775
        %v1812 = vadd.f32 %v1637, %v1779
        %v1813 = vadd.f32 %v1638, %v1783
        %v1814 = vadd.f32 %v1639, %v1763
        %v1815 = vadd.f32 %v1640, %v1767
        %v1816 = vadd.f32 %v1641, %v1771
        %v1817 = vadd.f32 %v1642, %v1775
        %v1818 = vadd.f32 %v1643, %v1779
        %v1819 = vadd.f32 %v1644, %v1783
        %v1820 = vadd.f32 %v1645, %v1763
        %v1821 = vadd.f32 %v1646, %v1767
        %v1822 = vadd.f32 %v1647, %v1771
        %v1823 = vadd.f32 %v1648, %v1775
        %v1824 = vadd.f32 %v1649, %v1779
        %v1825 = vadd.f32 %v1650, %v1783
        %v1826 = vadd.f32 %v1651, %v1763
        %v1827 = vadd.f32 %v1652, %v1767
        %v1828 = vadd.f32 %v1653, %v1771
        %v1829 = vadd.f32 %v1654, %v1775
        %v1830 = vadd.f32 %v1655, %v1779
        %v1831 = vadd.f32 %v1656, %v1783
        %v1832 = vadd.f32 %v1657, %v1763
        %v1833 = vadd.f32 %v1658, %v1767
        %v1834 = vadd.f32 %v1659, %v1771
        %v1835 = vadd.f32 %v1660, %v1775
        %v1836 = vadd.f32 %v1661, %v1779
        %v1837 = vadd.f32 %v1662, %v1783
        %v1838 = vadd.f32 %v1663, %v1763
        %v1839 = vadd.f32 %v1664, %v1767
        %v1840 = vadd.f32 %v1665, %v1771
        %v1841 = vadd.f32 %v1666, %v1775
        %v1842 = vadd.f32 %v1667, %v1779
        %v1843 = vadd.f32 %v1668, %v1783
        %v1844 = vadd.f32 %v1669, %v1763
        %v1845 = vadd.f32 %v1670, %v1767
        %v1846 = vadd.f32 %v1671, %v1771
        %v1847 = vadd.f32 %v1672, %v1775
        %v1848 = vadd.f32 %v1673, %v1779
        %v1849 = vadd.f32 %v1674, %v1783
        %v1850 = vadd.f32 %v1675, %v1763
        %v1851 = vadd.f32 %v1676, %v1767
        %v1852 = vadd.f32 %v1677, %v1771
        %v1853 = vadd.f32 %v1678, %v1775
        %v1854 = vadd.f32 %v1679, %v1779
        %v1855 = vadd.f32 %v1680, %v1783
        %v1856 = vadd.f32 %v1681, %v1763
        %v1857 = vadd.f32 %v1682, %v1767
        %v1858 = vadd.f32 %v1683, %v1771
        %v1859 = vadd.f32 %v1684, %v1775
        %v1860 = vadd.f32 %v1685, %v1779
        %v1861 = vadd.f32 %v1686, %v1783
        %v1862 = vadd.f32 %v1687, %v1763
        %v1863 = vadd.f32 %v1688, %v1767
        %v1864 = vadd.f32 %v1689, %v1771
        %v1865 = vadd.f32 %v1690, %v1775
        %v1866 = vadd.f32 %v1691, %v1779
        %v1867 = vadd.f32 %v1692, %v1783
        %v1868 = vadd.f32 %v1693, %v1763
        %v1869 = vadd.f32 %v1694, %v1767
        %v1870 = vadd.f32 %v1695, %v1771
        %v1871 = vadd.f32 %v1696, %v1775
        %v1872 = vadd.f32 %v1697, %v1779
        %v1873 = vadd.f32 %v1698, %v1783
        %v1874 = vadd.f32 %v1699, %v1763
        %v1875 = vadd.f32 %v1700, %v1767
        %v1876 = vadd.f32 %v1701, %v1771
        %v1877 = vadd.f32 %v1702, %v1775
        %v1878 = vadd.f32 %v1703, %v1779
        %v1879 = vadd.f32 %v1704, %v1783
        %v1880 = vadd.f32 %v1705, %v1763
        %v1881 = vadd.f32 %v1706, %v1767
        %v1882 = vadd.f32 %v1707, %v1771
        %v1883 = vadd.f32 %v1708, %v1775
        %v1884 = vadd.f32 %v1709, %v1779
        %v1885 = vadd.f32 %v1710, %v1783
        %v1886 = vadd.f32 %v1711, %v1763
        %v1887 = vadd.f32 %v1712, %v1767
        %v1888 = vadd.f32 %v1713, %v1771
        %v1889 = vadd.f32 %v1714, %v1775
        %v1890 = vadd.f32 %v1715, %v1779
        %v1891 = vadd.f32 %v1716, %v1783
        %v1892 = vadd.f32 %v1717, %v1763
        %v1893 = vadd.f32 %v1718, %v1767
        %v1894 = vadd.f32 %v1719, %v1771
        %v1895 = vadd.f32 %v1720, %v1775
        %v1896 = vadd.f32 %v1721, %v1779
        %v1897 = vadd.f32 %v1722, %v1783
        %v1898 = vadd.f32 %v1723, %v1763
        %v1899 = vadd.f32 %v1724, %v1767
        %v1900 = vadd.f32 %v1725, %v1771
        %v1901 = vadd.f32 %v1726, %v1775
        %v1902 = vadd.f32 %v1727, %v1779
        %v1903 = vadd.f32 %v1728, %v1783
        %v1904 = vadd.f32 %v1729, %v1763
        %v1905 = vadd.f32 %v1730, %v1767
        %v1906 = vadd.f32 %v1731, %v1771
        %v1907 = vadd.f32 %v1732, %v1775
        %v1908 = vadd.f32 %v1733, %v1779
        %v1909 = vadd.f32 %v1734, %v1783
        %v1910 = vadd.f32 %v1735, %v1763
        %v1911 = vadd.f32 %v1736, %v1767
        %v1912 = vadd.f32 %v1737, %v1771
        %v1913 = vadd.f32 %v1738, %v1775
        %v1914 = vadd.f32 %v1739, %v1779
        %v1915 = vadd.f32 %v1740, %v1783
        %v1916 = vadd.f32 %v1741, %v1763
        %v1917 = vadd.f32 %v1742, %v1767
        %v1918 = vadd.f32 %v1743, %v1771
        %v1919 = vadd.f32 %v1744, %v1775
        %v1920 = vadd.f32 %v1745, %v1779
        %v1921 = vadd.f32 %v1746, %v1783
        %v1922 = vadd.f32 %v1747, %v1763
        %v1923 = vadd.f32 %v1748, %v1767
        %v1924 = vadd.f32 %v1749, %v1771
        %v1925 = vadd.f32 %v1750, %v1775
        %v1926 = vadd.f32 %v1751, %v1779
        %v1927 = vadd.f32 %v1752, %v1783
        %v1928 = vadd.f32 %v1753, %v1763
        %v1929 = vadd.f32 %v1754, %v1767
        %v1930 = vadd.f32 %v1755, %v1771
        %v1931 = vadd.f32 %v1756, %v1775
        %v1932 = vadd.f32 %v1757, %v1779
        %v1933 = vadd.f32 %v1758, %v1783
        %1934 = vst [vmem:[%s282] sm:$0xff] %v1790
        %1935 = vst [vmem:[%s282 + $0x8] sm:$0xff] %v1791
        %1936 = vst [vmem:[%s282 + $0x10] sm:$0xff] %v1792
        %1937 = vst [vmem:[%s282 + $0x18] sm:$0xff] %v1793
        %1938 = vst [vmem:[%s282 + $0x20] sm:$0xff] %v1794
        %1939 = vst [vmem:[%s282 + $0x28] sm:$0xff] %v1795
        %1940 = vst [vmem:[%s282 + $0x30] sm:$0xff] %v1796
        %1941 = vst [vmem:[%s282 + $0x38] sm:$0xff] %v1797
        %1942 = vst [vmem:[%s282 + $0x40] sm:$0xff] %v1798
        %1943 = vst [vmem:[%s282 + $0x48] sm:$0xff] %v1799
        %1944 = vst [vmem:[%s282 + $0x50] sm:$0xff] %v1800
        %1945 = vst [vmem:[%s282 + $0x58] sm:$0xff] %v1801
        %1946 = vst [vmem:[%s282 + $0x60] sm:$0xff] %v1802
        %1947 = vst [vmem:[%s282 + $0x68] sm:$0xff] %v1803
        %1948 = vst [vmem:[%s282 + $0x70] sm:$0xff] %v1804
        %1949 = vst [vmem:[%s282 + $0x78] sm:$0xff] %v1805
        %1950 = vst [vmem:[%s282 + $0x80] sm:$0xff] %v1806
        %1951 = vst [vmem:[%s282 + $0x88] sm:$0xff] %v1807
        %1952 = vst [vmem:[%s282 + $0x90] sm:$0xff] %v1808
        %1953 = vst [vmem:[%s282 + $0x98] sm:$0xff] %v1809
        %1954 = vst [vmem:[%s282 + $0xa0] sm:$0xff] %v1810
        %1955 = vst [vmem:[%s282 + $0xa8] sm:$0xff] %v1811
        %1956 = vst [vmem:[%s282 + $0xb0] sm:$0xff] %v1812
        %1957 = vst [vmem:[%s282 + $0xb8] sm:$0xff] %v1813
        %1958 = vst [vmem:[%s282 + $0xc0] sm:$0xff] %v1814
        %1959 = vst [vmem:[%s282 + $0xc8] sm:$0xff] %v1815
        %1960 = vst [vmem:[%s282 + $0xd0] sm:$0xff] %v1816
        %1961 = vst [vmem:[%s282 + $0xd8] sm:$0xff] %v1817
        %1962 = vst [vmem:[%s282 + $0xe0] sm:$0xff] %v1818
        %1963 = vst [vmem:[%s282 + $0xe8] sm:$0xff] %v1819
        %1964 = vst [vmem:[%s282 + $0xf0] sm:$0xff] %v1820
        %1965 = vst [vmem:[%s282 + $0xf8] sm:$0xff] %v1821
        %1966 = vst [vmem:[%s282 + $0x100] sm:$0xff] %v1822
        %1967 = vst [vmem:[%s282 + $0x108] sm:$0xff] %v1823
        %1968 = vst [vmem:[%s282 + $0x110] sm:$0xff] %v1824
        %1969 = vst [vmem:[%s282 + $0x118] sm:$0xff] %v1825
        %1970 = vst [vmem:[%s282 + $0x120] sm:$0xff] %v1826
        %1971 = vst [vmem:[%s282 + $0x128] sm:$0xff] %v1827
        %1972 = vst [vmem:[%s282 + $0x130] sm:$0xff] %v1828
        %1973 = vst [vmem:[%s282 + $0x138] sm:$0xff] %v1829
        %1974 = vst [vmem:[%s282 + $0x140] sm:$0xff] %v1830
        %1975 = vst [vmem:[%s282 + $0x148] sm:$0xff] %v1831
        %1976 = vst [vmem:[%s282 + $0x150] sm:$0xff] %v1832
        %1977 = vst [vmem:[%s282 + $0x158] sm:$0xff] %v1833
        %1978 = vst [vmem:[%s282 + $0x160] sm:$0xff] %v1834
        %1979 = vst [vmem:[%s282 + $0x168] sm:$0xff] %v1835
        %1980 = vst [vmem:[%s282 + $0x170] sm:$0xff] %v1836
        %1981 = vst [vmem:[%s282 + $0x178] sm:$0xff] %v1837
        %1982 = vst [vmem:[%s282 + $0x180] sm:$0xff] %v1838
        %1983 = vst [vmem:[%s282 + $0x188] sm:$0xff] %v1839
        %1984 = vst [vmem:[%s282 + $0x190] sm:$0xff] %v1840
        %1985 = vst [vmem:[%s282 + $0x198] sm:$0xff] %v1841
        %1986 = vst [vmem:[%s282 + $0x1a0] sm:$0xff] %v1842
        %1987 = vst [vmem:[%s282 + $0x1a8] sm:$0xff] %v1843
        %1988 = vst [vmem:[%s282 + $0x1b0] sm:$0xff] %v1844
        %1989 = vst [vmem:[%s282 + $0x1b8] sm:$0xff] %v1845
        %1990 = vst [vmem:[%s282 + $0x1c0] sm:$0xff] %v1846
        %1991 = vst [vmem:[%s282 + $0x1c8] sm:$0xff] %v1847
        %1992 = vst [vmem:[%s282 + $0x1d0] sm:$0xff] %v1848
        %1993 = vst [vmem:[%s282 + $0x1d8] sm:$0xff] %v1849
        %1994 = vst [vmem:[%s282 + $0x1e0] sm:$0xff] %v1850
        %1995 = vst [vmem:[%s282 + $0x1e8] sm:$0xff] %v1851
        %1996 = vst [vmem:[%s282 + $0x1f0] sm:$0xff] %v1852
        %1997 = vst [vmem:[%s282 + $0x1f8] sm:$0xff] %v1853
        %1998 = vst [vmem:[%s282 + $0x200] sm:$0xff] %v1854
        %1999 = vst [vmem:[%s282 + $0x208] sm:$0xff] %v1855
        %2000 = vst [vmem:[%s282 + $0x210] sm:$0xff] %v1856
        %2001 = vst [vmem:[%s282 + $0x218] sm:$0xff] %v1857
        %2002 = vst [vmem:[%s282 + $0x220] sm:$0xff] %v1858
        %2003 = vst [vmem:[%s282 + $0x228] sm:$0xff] %v1859
        %2004 = vst [vmem:[%s282 + $0x230] sm:$0xff] %v1860
        %2005 = vst [vmem:[%s282 + $0x238] sm:$0xff] %v1861
        %2006 = vst [vmem:[%s282 + $0x240] sm:$0xff] %v1862
        %2007 = vst [vmem:[%s282 + $0x248] sm:$0xff] %v1863
        %2008 = vst [vmem:[%s282 + $0x250] sm:$0xff] %v1864
        %2009 = vst [vmem:[%s282 + $0x258] sm:$0xff] %v1865
        %2010 = vst [vmem:[%s282 + $0x260] sm:$0xff] %v1866
        %2011 = vst [vmem:[%s282 + $0x268] sm:$0xff] %v1867
        %2012 = vst [vmem:[%s282 + $0x270] sm:$0xff] %v1868
        %2013 = vst [vmem:[%s282 + $0x278] sm:$0xff] %v1869
        %2014 = vst [vmem:[%s282 + $0x280] sm:$0xff] %v1870
        %2015 = vst [vmem:[%s282 + $0x288] sm:$0xff] %v1871
        %2016 = vst [vmem:[%s282 + $0x290] sm:$0xff] %v1872
        %2017 = vst [vmem:[%s282 + $0x298] sm:$0xff] %v1873
        %2018 = vst [vmem:[%s282 + $0x2a0] sm:$0xff] %v1874
        %2019 = vst [vmem:[%s282 + $0x2a8] sm:$0xff] %v1875
        %2020 = vst [vmem:[%s282 + $0x2b0] sm:$0xff] %v1876
        %2021 = vst [vmem:[%s282 + $0x2b8] sm:$0xff] %v1877
        %2022 = vst [vmem:[%s282 + $0x2c0] sm:$0xff] %v1878
        %2023 = vst [vmem:[%s282 + $0x2c8] sm:$0xff] %v1879
        %2024 = vst [vmem:[%s282 + $0x2d0] sm:$0xff] %v1880
        %2025 = vst [vmem:[%s282 + $0x2d8] sm:$0xff] %v1881
        %2026 = vst [vmem:[%s282 + $0x2e0] sm:$0xff] %v1882
        %2027 = vst [vmem:[%s282 + $0x2e8] sm:$0xff] %v1883
        %2028 = vst [vmem:[%s282 + $0x2f0] sm:$0xff] %v1884
        %2029 = vst [vmem:[%s282 + $0x2f8] sm:$0xff] %v1885
        %2030 = vst [vmem:[%s282 + $0x300] sm:$0xff] %v1886
        %2031 = vst [vmem:[%s282 + $0x308] sm:$0xff] %v1887
        %2032 = vst [vmem:[%s282 + $0x310] sm:$0xff] %v1888
        %2033 = vst [vmem:[%s282 + $0x318] sm:$0xff] %v1889
        %2034 = vst [vmem:[%s282 + $0x320] sm:$0xff] %v1890
        %2035 = vst [vmem:[%s282 + $0x328] sm:$0xff] %v1891
        %2036 = vst [vmem:[%s282 + $0x330] sm:$0xff] %v1892
        %2037 = vst [vmem:[%s282 + $0x338] sm:$0xff] %v1893
        %2038 = vst [vmem:[%s282 + $0x340] sm:$0xff] %v1894
        %2039 = vst [vmem:[%s282 + $0x348] sm:$0xff] %v1895
        %2040 = vst [vmem:[%s282 + $0x350] sm:$0xff] %v1896
        %2041 = vst [vmem:[%s282 + $0x358] sm:$0xff] %v1897
        %2042 = vst [vmem:[%s282 + $0x360] sm:$0xff] %v1898
        %2043 = vst [vmem:[%s282 + $0x368] sm:$0xff] %v1899
        %2044 = vst [vmem:[%s282 + $0x370] sm:$0xff] %v1900
        %2045 = vst [vmem:[%s282 + $0x378] sm:$0xff] %v1901
        %2046 = vst [vmem:[%s282 + $0x380] sm:$0xff] %v1902
        %2047 = vst [vmem:[%s282 + $0x388] sm:$0xff] %v1903
        %2048 = vst [vmem:[%s282 + $0x390] sm:$0xff] %v1904
        %2049 = vst [vmem:[%s282 + $0x398] sm:$0xff] %v1905
        %2050 = vst [vmem:[%s282 + $0x3a0] sm:$0xff] %v1906
        %2051 = vst [vmem:[%s282 + $0x3a8] sm:$0xff] %v1907
        %2052 = vst [vmem:[%s282 + $0x3b0] sm:$0xff] %v1908
        %2053 = vst [vmem:[%s282 + $0x3b8] sm:$0xff] %v1909
        %2054 = vst [vmem:[%s282 + $0x3c0] sm:$0xff] %v1910
        %2055 = vst [vmem:[%s282 + $0x3c8] sm:$0xff] %v1911
        %2056 = vst [vmem:[%s282 + $0x3d0] sm:$0xff] %v1912
        %2057 = vst [vmem:[%s282 + $0x3d8] sm:$0xff] %v1913
        %2058 = vst [vmem:[%s282 + $0x3e0] sm:$0xff] %v1914
        %2059 = vst [vmem:[%s282 + $0x3e8] sm:$0xff] %v1915
        %2060 = vst [vmem:[%s282 + $0x3f0] sm:$0xff] %v1916
        %2061 = vst [vmem:[%s282 + $0x3f8] sm:$0xff] %v1917
        %2062 = vst [vmem:[%s282 + $0x400] sm:$0xff] %v1918
        %2063 = vst [vmem:[%s282 + $0x408] sm:$0xff] %v1919
        %2064 = vst [vmem:[%s282 + $0x410] sm:$0xff] %v1920
        %2065 = vst [vmem:[%s282 + $0x418] sm:$0xff] %v1921
        %2066 = vst [vmem:[%s282 + $0x420] sm:$0xff] %v1922
        %2067 = vst [vmem:[%s282 + $0x428] sm:$0xff] %v1923
        %2068 = vst [vmem:[%s282 + $0x430] sm:$0xff] %v1924
        %2069 = vst [vmem:[%s282 + $0x438] sm:$0xff] %v1925
        %2070 = vst [vmem:[%s282 + $0x440] sm:$0xff] %v1926
        %2071 = vst [vmem:[%s282 + $0x448] sm:$0xff] %v1927
        %2072 = vst [vmem:[%s282 + $0x450] sm:$0xff] %v1928
        %2073 = vst [vmem:[%s282 + $0x458] sm:$0xff] %v1929
        %2074 = vst [vmem:[%s282 + $0x460] sm:$0xff] %v1930
        %2075 = vst [vmem:[%s282 + $0x468] sm:$0xff] %v1931
        %2076 = vst [vmem:[%s282 + $0x470] sm:$0xff] %v1932
        %2077 = vst [vmem:[%s282 + $0x478] sm:$0xff] %v1933
        %s2078 = sand.u32 %s127, 1
        %s2079 = scalar_lea.sflag [#allocation4], %s2078
        %s2080 = sand.u32 %s127, 1
        %s2081 = smul.addr %s2080, 1152
        %s2082 = scalar_lea.vmem [#allocation10], %s2081
        // Predicated region
        $region53: #{tpu_custom_call.1} parent=35 // pred_check
          %p2083 = pneg %p137
        $region54: #{tpu_custom_call.1} parent=35 // pred_check_branch
          %2085 = sbr.rel (%p2083) target = $region56
        $region55: #{tpu_custom_call.1} parent=35 // pred_region
          %s2086 = smul.u32 24, %s25
          %s2088 = ssub.s32 18432, 18432
          %2089 = vsyncadd %s2079, %s2088
          %s2090 = smul.addr %s2086, 6
          %s2091 = smul.addr %s2090, 128
          %s2092 = scalar_lea.hbm %s4, %s2091
          %s2093 = sshll.u32 %s2082, 4
          %s2094 = int_to_ptr.vmem [resolvable:$true] %s2093
          %2099 = dma.vmem_to_hbm [thread:$0]  %s2094, 18432, %s2092, %s2079, 768, 768, 48
        $region56: #{tpu_custom_call.1} parent=35 // pred_fallthru
          _
      $region36: #{tpu_custom_call.1} parent=5 // pred_fallthru
        _
      %p2100 = scmp.le.s32.totalorder 2, %s20
      // Predicated region
      $region57: #{tpu_custom_call.1} parent=5 // pred_check
        %p2101 = pneg %p2100
      $region58: #{tpu_custom_call.1} parent=5 // pred_check_branch
        %2103 = sbr.rel (%p2101) target = $region60
      $region59: #{tpu_custom_call.1} parent=5 // pred_region
        %s2104 = ssub.s32 %s20, 2
        // Predicated region
        $region61: #{tpu_custom_call.1} parent=59 // pred_check
          %p2105 = pneg %p143
        $region62: #{tpu_custom_call.1} parent=59 // pred_check_branch
          %2107 = sbr.rel (%p2105) target = $region64
        $region63: #{tpu_custom_call.1} parent=59 // pred_region
          %s2108 = sand.u32 %s128, 1
          %s2109 = scalar_lea.sflag [#allocation4], %s2108
          %s2110 = sand.u32 %s128, 1
          %s2111 = smul.addr %s2110, 1152
          %s2112 = scalar_lea.vmem [#allocation10], %s2111
          %2113 = dma.done %s2109, 18432
        $region64: #{tpu_custom_call.1} parent=59 // pred_fallthru
          _
      $region60: #{tpu_custom_call.1} parent=5 // pred_fallthru
        _
    $region6: #{tpu_custom_call.1} parent=1 // loop_footer
      %s24 = sadd.s32 1, %s20
    $region7: #{tpu_custom_call.1} parent=1 // loop_footer_branch
      %19 = sbr.rel target = $region3
    $region8: #{tpu_custom_call.1} parent=1 // loop_exit
      _
    %2114 = vsyncpa [#allocation3], 1
    %s2115 = scalar_lea.sflag [#allocation3], 1
    %2116 = vsyncpa %s2115, 1
    %2117 = vsyncpa [#allocation6], 1
    %s2118 = scalar_lea.sflag [#allocation6], 1
    %2119 = vsyncpa %s2118, 1
    %2120 = vsyncpa [#allocation9], 1
    %2121 = vsyncpa [#allocation4], 1
    %s2122 = scalar_lea.sflag [#allocation4], 1
    %2123 = vsyncpa %s2122, 1

</llo_original>
